<compile_context>
chip_gen: v5e
topology: v5e:2x2
jax: 0.10.0
libtpu: 0.0.40
codegen_flags: <defaults>
</compile_context>

<pallas_src>
import jax
import jax.numpy as jnp
import numpy as np
from jax.experimental import pallas as pl
from jax.experimental.pallas import tpu as pltpu  # noqa: F401  (imported for TPU backend use)

# ---- static model config: Transformer(dim=32, depth=2, heads=4, dim_head=8, mlp_dim=64) ----
DIM = 32
DEPTH = 2
HEADS = 4
DIM_HEAD = 8
INNER = HEADS * DIM_HEAD        # 32 -> Attention.project_out == True
MLP = 64
B = 2
N = 8                           # tokens: 1 "cls"-like token + 7 prompted tokens
BN = B * N                      # 16
SCALE = DIM_HEAD ** -0.5
EPS = 1e-5                      # nn.LayerNorm default
NEG = -1e30                     # cross-batch attention bias (exp() underflows to 0)

# ---- constant-slab row layout (width DIM=32, everything pre-broadcast to BN rows) ----
CB = 6 * BN                                   # per-layer constant block (96 rows)
O_LAG, O_LAB, O_BO, O_LFG, O_LFB, O_B2 = 0, BN, 2 * BN, 3 * BN, 4 * BN, 5 * BN
R_GN = DEPTH * CB                             # final LayerNorm gamma  (192)
R_BN = R_GN + BN                              # final LayerNorm beta   (208)
R_QM = R_BN + BN                              # stacked q head mask    (224, 64 rows)
R_OM = R_QM + HEADS * BN                      # stacked out head mask  (288, 64 rows)
R_BB = R_OM + HEADS * BN                      # tiled batch bias       (352, 64 rows, cols 0..15)
CONST_ROWS = R_BB + HEADS * BN                # 416

# ---- weight-slab row layout (width 128, zero lane-padded, sublane-aligned sections) ----
O_WQKV, O_WO, O_W1, O_W2, O_B1 = 0, DIM, 2 * DIM, 3 * DIM, 3 * DIM + MLP
WB = 3 * DIM + MLP + BN                       # per-layer block = 176 rows


# ----------------------------- in-kernel math helpers -----------------------------
def _layernorm(x, g, b):
    # PyTorch LayerNorm semantics: biased variance, eps inside sqrt. g/b are (BN, DIM).
    mu = jnp.mean(x, axis=-1, keepdims=True)
    d = x - mu
    var = jnp.mean(d * d, axis=-1, keepdims=True)
    return d * jax.lax.rsqrt(var + EPS) * g + b


def _erf(x):
    # Abramowitz & Stegun 7.1.26 (max abs err ~1.5e-7); exact-GELU path.
    a1, a2, a3, a4, a5 = 0.254829592, -0.284496736, 1.421413741, -1.453152027, 1.061405429
    p = 0.3275911
    s = jnp.where(x >= 0.0, 1.0, -1.0)
    ax = jnp.abs(x)
    t = 1.0 / (1.0 + p * ax)
    poly = ((((a5 * t + a4) * t + a3) * t + a2) * t + a1) * t
    return s * (1.0 - poly * jnp.exp(-ax * ax))


def _gelu_exact(x):
    return 0.5 * x * (1.0 + _erf(x * 0.7071067811865476))


# ----------------------------------- kernel ---------------------------------------
def transformer_kernel(x_ref, pr_ref, c_ref, w_ref, o_ref):
    # host-precomputed constants (no iota/compare prologue)
    qmask = c_ref[R_QM:R_QM + HEADS * BN, :]          # (64, 32)  scale folded in
    omask = c_ref[R_OM:R_OM + HEADS * BN, :]          # (64, 32)
    bias = c_ref[R_BB:R_BB + HEADS * BN, 0:BN]        # (64, 16)  block-diag, tiled per head

    x = x_ref[...]                                    # (BN, DIM), carried in vregs
    for l in range(DEPTH):                            # static depth loop (fully unrolled)
        cb = l * CB
        wb = l * WB

        # torch.cat((x[:, :1], prompt[l] + x[:, 1:]), dim=1) — prompt pre-padded with a
        # zero row at token 0, so this is one aligned full-tile add.
        x = x + pr_ref[l * BN:(l + 1) * BN, :]

        # ------------------ Attention (pre-norm, residual) ------------------
        h = _layernorm(x,
                       c_ref[cb + O_LAG:cb + O_LAG + BN, :],
                       c_ref[cb + O_LAB:cb + O_LAB + BN, :])
        qkv = jnp.dot(h, w_ref[wb + O_WQKV:wb + O_WQKV + DIM, 0:3 * INNER],
                      preferred_element_type=jnp.float32)            # (16, 96)
        q = qkv[:, 0:INNER]
        k = qkv[:, INNER:2 * INNER]
        v = qkv[:, 2 * INNER:3 * INNER]

        # All heads in one MXU push: stack 4 masked copies of q -> (64, 32); the mask
        # zeros the other heads' columns (and folds the 1/sqrt(d) scale), so each
        # 16-row block contracts only its own head's 8 dims against k.
        q_stack = jnp.concatenate([q, q, q, q], axis=0) * qmask       # (64, 32)
        logits = jax.lax.dot_general(q_stack, k, (((1,), (1,)), ((), ())),
                                     preferred_element_type=jnp.float32)  # (64, 16)
        logits = logits + bias                        # no cross-batch attention
        logits = logits - jnp.max(logits, axis=-1, keepdims=True)
        e = jnp.exp(logits)
        a = e * pl.reciprocal(jnp.sum(e, axis=-1, keepdims=True), approx=True)
        av = jnp.dot(a, v, preferred_element_type=jnp.float32) * omask   # (64, 32)
        # recombine heads: output column c comes from head c // DIM_HEAD
        o_cat = (av[0:BN, :] + av[BN:2 * BN, :]) + (av[2 * BN:3 * BN, :] + av[3 * BN:4 * BN, :])

        x = x + jnp.dot(o_cat, w_ref[wb + O_WO:wb + O_WO + INNER, 0:DIM],
                        preferred_element_type=jnp.float32) \
              + c_ref[cb + O_BO:cb + O_BO + BN, :]                   # attn(x) + x

        # ------------------ FeedForward (pre-norm, residual) ------------------
        h = _layernorm(x,
                       c_ref[cb + O_LFG:cb + O_LFG + BN, :],
                       c_ref[cb + O_LFB:cb + O_LFB + BN, :])
        h1 = jnp.dot(h, w_ref[wb + O_W1:wb + O_W1 + DIM, 0:MLP],
                     preferred_element_type=jnp.float32) \
           + w_ref[wb + O_B1:wb + O_B1 + BN, 0:MLP]                  # b1 pre-broadcast
        h1 = _gelu_exact(h1)
        x = x + jnp.dot(h1, w_ref[wb + O_W2:wb + O_W2 + MLP, 0:DIM],
                        preferred_element_type=jnp.float32) \
              + c_ref[cb + O_B2:cb + O_B2 + BN, :]                   # ff(x) + x
        # TODO(synk): nn.Dropout layers (p=0.0) are identities and therefore omitted.

    # final self.norm — flat lane-dense (16, 32) store, reshaped in the wrapper
    o_ref[...] = _layernorm(x, c_ref[R_GN:R_GN + BN, :], c_ref[R_BN:R_BN + BN, :])


# ------------------------------ host-side packing ----------------------------------
def _head_masks():
    qm = np.zeros((HEADS, INNER), np.float32)
    om = np.zeros((HEADS, INNER), np.float32)
    for h in range(HEADS):
        qm[h, h * DIM_HEAD:(h + 1) * DIM_HEAD] = SCALE
        om[h, h * DIM_HEAD:(h + 1) * DIM_HEAD] = 1.0
    return np.repeat(qm, BN, axis=0), np.repeat(om, BN, axis=0)      # (64, 32) each


def _batch_bias():
    bb = np.full((BN, BN), NEG, np.float32)
    for b in range(B):
        bb[b * N:(b + 1) * N, b * N:(b + 1) * N] = 0.0
    pad = np.zeros((HEADS * BN, DIM), np.float32)
    pad[:, :BN] = np.tile(bb, (HEADS, 1))                            # (64, 16) tiled per head
    return pad


def pack_const_slab(p):
    def bc(v):                                  # (DIM,) -> (BN, DIM) pre-broadcast row
        return jnp.broadcast_to(v.reshape(1, DIM), (BN, DIM))
    blocks = []
    for l in range(DEPTH):
        blocks += [bc(p['lag'][l]), bc(p['lab'][l]), bc(p['bo'][l]),
                   bc(p['lfg'][l]), bc(p['lfb'][l]), bc(p['b2'][l])]
    blocks += [bc(p['gn']), bc(p['bn'])]
    qm, om = _head_masks()
    blocks += [jnp.asarray(qm), jnp.asarray(om), jnp.asarray(_batch_bias())]
    slab = jnp.concatenate(blocks, axis=0).astype(jnp.float32)       # (416, 32)
    assert slab.shape == (CONST_ROWS, DIM)
    return slab


def pack_weight_slab(p):
    def pad128(w):
        return jnp.pad(w, ((0, 0), (0, 128 - w.shape[1])))
    rows = []
    for l in range(DEPTH):
        rows += [pad128(p['wqkv'][l]),                                # rows  0.. 31, cols 0..95
                 pad128(p['wo'][l]),                                  # rows 32.. 63, cols 0..31
                 pad128(p['w1'][l]),                                  # rows 64.. 95, cols 0..63
                 pad128(p['w2'][l]),                                  # rows 96..159, cols 0..31
                 pad128(jnp.broadcast_to(p['b1'][l].reshape(1, MLP), (BN, MLP)))]  # 160..175
    slab = jnp.concatenate(rows, axis=0).astype(jnp.float32)         # (352, 128)
    assert slab.shape == (DEPTH * WB, 128)
    return slab


# ---------------------------------- wrapper ----------------------------------------
def transformer_pallas(x, prompt, p):
    x_flat = x.reshape(BN, DIM)
    # zero row at token 0 so the in-kernel prompt add is a single full-tile add
    pr_slab = jnp.pad(prompt, ((0, 0), (0, 0), (1, 0), (0, 0))).reshape(DEPTH * BN, DIM)
    c_slab = pack_const_slab(p)
    w_slab = pack_weight_slab(p)
    out_flat = pl.pallas_call(
        transformer_kernel,
        out_shape=jax.ShapeDtypeStruct((BN, DIM), x.dtype),
    )(x_flat, pr_slab, c_slab, w_slab)
    return out_flat.reshape(B, N, DIM)


# ------------------------- deterministic parameter init ----------------------------
def init_params(key):
    ks = jax.random.split(key, 8)

    def w(k, shape, scale=0.1):
        return (scale * jax.random.normal(k, shape)).astype(jnp.float32)

    return dict(
        lag=jnp.ones((DEPTH, DIM), jnp.float32),   # nn.LayerNorm default init
        lab=jnp.zeros((DEPTH, DIM), jnp.float32),
        wqkv=w(ks[0], (DEPTH, DIM, 3 * INNER)),    # to_qkv (bias=False), stored (in, out)
        wo=w(ks[1], (DEPTH, INNER, DIM)),          # to_out linear, stored (in, out)
        bo=w(ks[2], (DEPTH, DIM), 0.02),
        lfg=jnp.ones((DEPTH, DIM), jnp.float32),
        lfb=jnp.zeros((DEPTH, DIM), jnp.float32),
        w1=w(ks[3], (DEPTH, DIM, MLP)),
        b1=w(ks[4], (DEPTH, MLP), 0.02),
        w2=w(ks[5], (DEPTH, MLP, DIM)),
        b2=w(ks[6], (DEPTH, DIM), 0.02),
        gn=jnp.ones((DIM,), jnp.float32),
        bn=jnp.zeros((DIM,), jnp.float32),
    )


# ------------------------------ pure-JAX reference ---------------------------------
def _ln_ref(x, g, b):
    mu = x.mean(-1, keepdims=True)
    var = ((x - mu) ** 2).mean(-1, keepdims=True)
    return (x - mu) / jnp.sqrt(var + EPS) * g + b


def reference(x, prompt, p):
    Bq, Nq, _ = x.shape
    for l in range(DEPTH):
        x = jnp.concatenate([x[:, :1, :], prompt[l] + x[:, 1:, :]], axis=1)
        h = _ln_ref(x, p['lag'][l], p['lab'][l])
        qkv = h @ p['wqkv'][l]
        q, k, v = jnp.split(qkv, 3, axis=-1)
        split = lambda t: t.reshape(Bq, Nq, HEADS, DIM_HEAD).transpose(0, 2, 1, 3)
        q, k, v = split(q), split(k), split(v)
        dots = jnp.einsum('bhnd,bhmd->bhnm', q, k) * SCALE
        a = jax.nn.softmax(dots, axis=-1)
        o = jnp.einsum('bhnm,bhmd->bhnd', a, v).transpose(0, 2, 1, 3).reshape(Bq, Nq, INNER)
        x = o @ p['wo'][l] + p['bo'][l] + x
        h = _ln_ref(x, p['lfg'][l], p['lfb'][l])
        h = jax.nn.gelu(h @ p['w1'][l] + p['b1'][l], approximate=False)
        x = h @ p['w2'][l] + p['b2'][l] + x
    return _ln_ref(x, p['gn'], p['bn'])


# ------------------------------------- main ----------------------------------------
if __name__ == "__main__":
    key = jax.random.PRNGKey(0)
    kx, kp, kw = jax.random.split(key, 3)
    x = jax.random.normal(kx, (B, N, DIM), jnp.float32)
    prompt = jax.random.normal(kp, (DEPTH, B, N - 1, DIM), jnp.float32)
    params = init_params(kw)

    out = transformer_pallas(x, prompt, params)
    out = jax.block_until_ready(out)

    ref = reference(x, prompt, params)
    assert out.shape == (B, N, DIM)
    np.testing.assert_allclose(np.asarray(out), np.asarray(ref), rtol=2e-3, atol=2e-3)
    print("KERNEL_OK")
</pallas_src>

<mosaic_0001>
module attributes {stable_mosaic.version = 11 : i64} {
  func.func @transformer_kernel(%arg0: memref<16x32xf32, #tpu.memory_space<vmem>>, %arg1: memref<32x32xf32, #tpu.memory_space<vmem>>, %arg2: memref<416x32xf32, #tpu.memory_space<vmem>>, %arg3: memref<352x128xf32, #tpu.memory_space<vmem>>, %arg4: memref<16x32xf32, #tpu.memory_space<vmem>>) attributes {dimension_semantics = [], scalar_prefetch = 0 : i64, scratch_operands = 0 : i64, tpu.core_type = #tpu.core_type<tc>} {
    %c224 = arith.constant 224 : index
    %c0 = arith.constant 0 : index
    %0 = vector.load %arg2[%c224, %c0] : memref<416x32xf32, #tpu.memory_space<vmem>>, vector<64x32xf32>
    %c288 = arith.constant 288 : index
    %c0_0 = arith.constant 0 : index
    %1 = vector.load %arg2[%c288, %c0_0] : memref<416x32xf32, #tpu.memory_space<vmem>>, vector<64x32xf32>
    %c352 = arith.constant 352 : index
    %c0_1 = arith.constant 0 : index
    %2 = vector.load %arg2[%c352, %c0_1] : memref<416x32xf32, #tpu.memory_space<vmem>>, vector<64x16xf32>
    %c0_2 = arith.constant 0 : index
    %c0_3 = arith.constant 0 : index
    %3 = vector.load %arg0[%c0_2, %c0_3] : memref<16x32xf32, #tpu.memory_space<vmem>>, vector<16x32xf32>
    %c0_4 = arith.constant 0 : index
    %c0_5 = arith.constant 0 : index
    %4 = vector.load %arg1[%c0_4, %c0_5] : memref<32x32xf32, #tpu.memory_space<vmem>>, vector<16x32xf32>
    %5 = arith.addf %3, %4 : vector<16x32xf32>
    %c0_6 = arith.constant 0 : index
    %c0_7 = arith.constant 0 : index
    %6 = vector.load %arg2[%c0_6, %c0_7] : memref<416x32xf32, #tpu.memory_space<vmem>>, vector<16x32xf32>
    %c16 = arith.constant 16 : index
    %c0_8 = arith.constant 0 : index
    %7 = vector.load %arg2[%c16, %c0_8] : memref<416x32xf32, #tpu.memory_space<vmem>>, vector<16x32xf32>
    %cst = arith.constant dense<0.000000e+00> : vector<16xf32>
    %8 = vector.multi_reduction <add>, %5, %cst [1] : vector<16x32xf32> to vector<16xf32>
    %9 = vector.shape_cast %8 : vector<16xf32> to vector<16x1xf32>
    %cst_9 = arith.constant 3.200000e+01 : f32
    %10 = vector.broadcast %cst_9 : f32 to vector<16x1xf32>
    %11 = arith.divf %9, %10 : vector<16x1xf32>
    %12 = vector.broadcast %11 : vector<16x1xf32> to vector<16x32xf32>
    %13 = arith.subf %5, %12 : vector<16x32xf32>
    %14 = arith.mulf %13, %13 : vector<16x32xf32>
    %cst_10 = arith.constant dense<0.000000e+00> : vector<16xf32>
    %15 = vector.multi_reduction <add>, %14, %cst_10 [1] : vector<16x32xf32> to vector<16xf32>
    %16 = vector.shape_cast %15 : vector<16xf32> to vector<16x1xf32>
    %cst_11 = arith.constant 3.200000e+01 : f32
    %17 = vector.broadcast %cst_11 : f32 to vector<16x1xf32>
    %18 = arith.divf %16, %17 : vector<16x1xf32>
    %cst_12 = arith.constant 9.99999974E-6 : f32
    %19 = vector.broadcast %cst_12 : f32 to vector<16x1xf32>
    %20 = arith.addf %18, %19 : vector<16x1xf32>
    %21 = math.rsqrt %20 : vector<16x1xf32>
    %22 = vector.broadcast %21 : vector<16x1xf32> to vector<16x32xf32>
    %23 = arith.mulf %13, %22 : vector<16x32xf32>
    %24 = arith.mulf %23, %6 : vector<16x32xf32>
    %25 = arith.addf %24, %7 : vector<16x32xf32>
    %c0_13 = arith.constant 0 : index
    %c0_14 = arith.constant 0 : index
    %26 = vector.load %arg3[%c0_13, %c0_14] : memref<352x128xf32, #tpu.memory_space<vmem>>, vector<32x96xf32>
    %cst_15 = arith.constant dense<0.000000e+00> : vector<16x96xf32>
    %27 = tpu.matmul %25, %26, %cst_15 {dimension_numbers = #tpu.dot_dimension_numbers<[1], [0], [0], [1], [0, 0, 1, 1], [], []>} : vector<16x32xf32>, vector<32x96xf32>, vector<16x96xf32> -> vector<16x96xf32>
    %28 = vector.extract_strided_slice %27 {offsets = [0, 0], sizes = [16, 32], strides = [1, 1]} : vector<16x96xf32> to vector<16x32xf32>
    %29 = vector.extract_strided_slice %27 {offsets = [0, 32], sizes = [16, 32], strides = [1, 1]} : vector<16x96xf32> to vector<16x32xf32>
    %30 = vector.extract_strided_slice %27 {offsets = [0, 64], sizes = [16, 32], strides = [1, 1]} : vector<16x96xf32> to vector<16x32xf32>
    %31 = tpu.concatenate %28, %28, %28, %28 in 0 : vector<16x32xf32>, vector<16x32xf32>, vector<16x32xf32>, vector<16x32xf32> -> vector<64x32xf32>
    %32 = arith.mulf %31, %0 : vector<64x32xf32>
    %cst_16 = arith.constant dense<0.000000e+00> : vector<64x16xf32>
    %33 = tpu.matmul %32, %29, %cst_16 {dimension_numbers = #tpu.dot_dimension_numbers<[1], [1], [0], [0], [0, 0, 1, 0], [], []>} : vector<64x32xf32>, vector<16x32xf32>, vector<64x16xf32> -> vector<64x16xf32>
    %34 = arith.addf %33, %2 : vector<64x16xf32>
    %cst_17 = arith.constant dense<0xFF800000> : vector<64xf32>
    %35 = vector.multi_reduction <maximumf>, %34, %cst_17 [1] : vector<64x16xf32> to vector<64xf32>
    %36 = vector.shape_cast %35 : vector<64xf32> to vector<64x1xf32>
    %37 = vector.broadcast %36 : vector<64x1xf32> to vector<64x16xf32>
    %38 = arith.subf %34, %37 : vector<64x16xf32>
    %39 = math.exp %38 : vector<64x16xf32>
    %cst_18 = arith.constant dense<0.000000e+00> : vector<64xf32>
    %40 = vector.multi_reduction <add>, %39, %cst_18 [1] : vector<64x16xf32> to vector<64xf32>
    %41 = vector.shape_cast %40 : vector<64xf32> to vector<64x1xf32>
    %42 = tpu.reciprocal %41 {approx = true} : vector<64x1xf32> -> vector<64x1xf32>
    %43 = vector.broadcast %42 : vector<64x1xf32> to vector<64x16xf32>
    %44 = arith.mulf %39, %43 : vector<64x16xf32>
    %cst_19 = arith.constant dense<0.000000e+00> : vector<64x32xf32>
    %45 = tpu.matmul %44, %30, %cst_19 {dimension_numbers = #tpu.dot_dimension_numbers<[1], [0], [0], [1], [0, 0, 1, 1], [], []>} : vector<64x16xf32>, vector<16x32xf32>, vector<64x32xf32> -> vector<64x32xf32>
    %46 = arith.mulf %45, %1 : vector<64x32xf32>
    %47 = vector.extract_strided_slice %46 {offsets = [0, 0], sizes = [16, 32], strides = [1, 1]} : vector<64x32xf32> to vector<16x32xf32>
    %48 = vector.extract_strided_slice %46 {offsets = [16, 0], sizes = [16, 32], strides = [1, 1]} : vector<64x32xf32> to vector<16x32xf32>
    %49 = arith.addf %47, %48 : vector<16x32xf32>
    %50 = vector.extract_strided_slice %46 {offsets = [32, 0], sizes = [16, 32], strides = [1, 1]} : vector<64x32xf32> to vector<16x32xf32>
    %51 = vector.extract_strided_slice %46 {offsets = [48, 0], sizes = [16, 32], strides = [1, 1]} : vector<64x32xf32> to vector<16x32xf32>
    %52 = arith.addf %50, %51 : vector<16x32xf32>
    %53 = arith.addf %49, %52 : vector<16x32xf32>
    %c32 = arith.constant 32 : index
    %c0_20 = arith.constant 0 : index
    %54 = vector.load %arg3[%c32, %c0_20] : memref<352x128xf32, #tpu.memory_space<vmem>>, vector<32x32xf32>
    %cst_21 = arith.constant dense<0.000000e+00> : vector<16x32xf32>
    %55 = tpu.matmul %53, %54, %cst_21 {dimension_numbers = #tpu.dot_dimension_numbers<[1], [0], [0], [1], [0, 0, 1, 1], [], []>} : vector<16x32xf32>, vector<32x32xf32>, vector<16x32xf32> -> vector<16x32xf32>
    %56 = arith.addf %5, %55 : vector<16x32xf32>
    %c32_22 = arith.constant 32 : index
    %c0_23 = arith.constant 0 : index
    %57 = vector.load %arg2[%c32_22, %c0_23] : memref<416x32xf32, #tpu.memory_space<vmem>>, vector<16x32xf32>
    %58 = arith.addf %56, %57 : vector<16x32xf32>
    %c48 = arith.constant 48 : index
    %c0_24 = arith.constant 0 : index
    %59 = vector.load %arg2[%c48, %c0_24] : memref<416x32xf32, #tpu.memory_space<vmem>>, vector<16x32xf32>
    %c64 = arith.constant 64 : index
    %c0_25 = arith.constant 0 : index
    %60 = vector.load %arg2[%c64, %c0_25] : memref<416x32xf32, #tpu.memory_space<vmem>>, vector<16x32xf32>
    %cst_26 = arith.constant dense<0.000000e+00> : vector<16xf32>
    %61 = vector.multi_reduction <add>, %58, %cst_26 [1] : vector<16x32xf32> to vector<16xf32>
    %62 = vector.shape_cast %61 : vector<16xf32> to vector<16x1xf32>
    %cst_27 = arith.constant 3.200000e+01 : f32
    %63 = vector.broadcast %cst_27 : f32 to vector<16x1xf32>
    %64 = arith.divf %62, %63 : vector<16x1xf32>
    %65 = vector.broadcast %64 : vector<16x1xf32> to vector<16x32xf32>
    %66 = arith.subf %58, %65 : vector<16x32xf32>
    %67 = arith.mulf %66, %66 : vector<16x32xf32>
    %cst_28 = arith.constant dense<0.000000e+00> : vector<16xf32>
    %68 = vector.multi_reduction <add>, %67, %cst_28 [1] : vector<16x32xf32> to vector<16xf32>
    %69 = vector.shape_cast %68 : vector<16xf32> to vector<16x1xf32>
    %cst_29 = arith.constant 3.200000e+01 : f32
    %70 = vector.broadcast %cst_29 : f32 to vector<16x1xf32>
    %71 = arith.divf %69, %70 : vector<16x1xf32>
    %cst_30 = arith.constant 9.99999974E-6 : f32
    %72 = vector.broadcast %cst_30 : f32 to vector<16x1xf32>
    %73 = arith.addf %71, %72 : vector<16x1xf32>
    %74 = math.rsqrt %73 : vector<16x1xf32>
    %75 = vector.broadcast %74 : vector<16x1xf32> to vector<16x32xf32>
    %76 = arith.mulf %66, %75 : vector<16x32xf32>
    %77 = arith.mulf %76, %59 : vector<16x32xf32>
    %78 = arith.addf %77, %60 : vector<16x32xf32>
    %c64_31 = arith.constant 64 : index
    %c0_32 = arith.constant 0 : index
    %79 = vector.load %arg3[%c64_31, %c0_32] : memref<352x128xf32, #tpu.memory_space<vmem>>, vector<32x64xf32>
    %cst_33 = arith.constant dense<0.000000e+00> : vector<16x64xf32>
    %80 = tpu.matmul %78, %79, %cst_33 {dimension_numbers = #tpu.dot_dimension_numbers<[1], [0], [0], [1], [0, 0, 1, 1], [], []>} : vector<16x32xf32>, vector<32x64xf32>, vector<16x64xf32> -> vector<16x64xf32>
    %c160 = arith.constant 160 : index
    %c0_34 = arith.constant 0 : index
    %81 = vector.load %arg3[%c160, %c0_34] : memref<352x128xf32, #tpu.memory_space<vmem>>, vector<16x64xf32>
    %82 = arith.addf %80, %81 : vector<16x64xf32>
    %cst_35 = arith.constant 5.000000e-01 : f32
    %83 = vector.broadcast %cst_35 : f32 to vector<16x64xf32>
    %84 = arith.mulf %83, %82 : vector<16x64xf32>
    %cst_36 = arith.constant 0.707106769 : f32
    %85 = vector.broadcast %cst_36 : f32 to vector<16x64xf32>
    %86 = arith.mulf %82, %85 : vector<16x64xf32>
    %cst_37 = arith.constant 0.000000e+00 : f32
    %87 = vector.broadcast %cst_37 : f32 to vector<16x64xf32>
    %88 = arith.cmpf oge, %86, %87 : vector<16x64xf32>
    %cst_38 = arith.constant 1.000000e+00 : f32
    %cst_39 = arith.constant -1.000000e+00 : f32
    %89 = vector.broadcast %cst_38 : f32 to vector<16x64xf32>
    %90 = vector.broadcast %cst_39 : f32 to vector<16x64xf32>
    %91 = arith.select %88, %89, %90 : vector<16x64xi1>, vector<16x64xf32>
    %92 = math.absf %86 : vector<16x64xf32>
    %cst_40 = arith.constant 0.327591091 : f32
    %93 = vector.broadcast %cst_40 : f32 to vector<16x64xf32>
    %94 = arith.mulf %93, %92 : vector<16x64xf32>
    %cst_41 = arith.constant 1.000000e+00 : f32
    %95 = vector.broadcast %cst_41 : f32 to vector<16x64xf32>
    %96 = arith.addf %95, %94 : vector<16x64xf32>
    %cst_42 = arith.constant 1.000000e+00 : f32
    %97 = vector.broadcast %cst_42 : f32 to vector<16x64xf32>
    %98 = arith.divf %97, %96 : vector<16x64xf32>
    %cst_43 = arith.constant 1.06140542 : f32
    %99 = vector.broadcast %cst_43 : f32 to vector<16x64xf32>
    %100 = arith.mulf %99, %98 : vector<16x64xf32>
    %cst_44 = arith.constant -1.45315206 : f32
    %101 = vector.broadcast %cst_44 : f32 to vector<16x64xf32>
    %102 = arith.addf %100, %101 : vector<16x64xf32>
    %103 = arith.mulf %102, %98 : vector<16x64xf32>
    %cst_45 = arith.constant 1.42141378 : f32
    %104 = vector.broadcast %cst_45 : f32 to vector<16x64xf32>
    %105 = arith.addf %103, %104 : vector<16x64xf32>
    %106 = arith.mulf %105, %98 : vector<16x64xf32>
    %cst_46 = arith.constant -0.284496725 : f32
    %107 = vector.broadcast %cst_46 : f32 to vector<16x64xf32>
    %108 = arith.addf %106, %107 : vector<16x64xf32>
    %109 = arith.mulf %108, %98 : vector<16x64xf32>
    %cst_47 = arith.constant 0.254829586 : f32
    %110 = vector.broadcast %cst_47 : f32 to vector<16x64xf32>
    %111 = arith.addf %109, %110 : vector<16x64xf32>
    %112 = arith.mulf %111, %98 : vector<16x64xf32>
    %cst_48 = arith.constant 0.000000e+00 : f32
    %113 = vector.broadcast %cst_48 : f32 to vector<16x64xf32>
    %114 = arith.subf %113, %92 : vector<16x64xf32>
    %115 = arith.mulf %114, %92 : vector<16x64xf32>
    %116 = math.exp %115 : vector<16x64xf32>
    %117 = arith.mulf %112, %116 : vector<16x64xf32>
    %cst_49 = arith.constant 1.000000e+00 : f32
    %118 = vector.broadcast %cst_49 : f32 to vector<16x64xf32>
    %119 = arith.subf %118, %117 : vector<16x64xf32>
    %120 = arith.mulf %91, %119 : vector<16x64xf32>
    %cst_50 = arith.constant 1.000000e+00 : f32
    %121 = vector.broadcast %cst_50 : f32 to vector<16x64xf32>
    %122 = arith.addf %121, %120 : vector<16x64xf32>
    %123 = arith.mulf %84, %122 : vector<16x64xf32>
    %c96 = arith.constant 96 : index
    %c0_51 = arith.constant 0 : index
    %124 = vector.load %arg3[%c96, %c0_51] : memref<352x128xf32, #tpu.memory_space<vmem>>, vector<64x32xf32>
    %cst_52 = arith.constant dense<0.000000e+00> : vector<16x32xf32>
    %125 = tpu.matmul %123, %124, %cst_52 {dimension_numbers = #tpu.dot_dimension_numbers<[1], [0], [0], [1], [0, 0, 1, 1], [], []>} : vector<16x64xf32>, vector<64x32xf32>, vector<16x32xf32> -> vector<16x32xf32>
    %126 = arith.addf %58, %125 : vector<16x32xf32>
    %c80 = arith.constant 80 : index
    %c0_53 = arith.constant 0 : index
    %127 = vector.load %arg2[%c80, %c0_53] : memref<416x32xf32, #tpu.memory_space<vmem>>, vector<16x32xf32>
    %128 = arith.addf %126, %127 : vector<16x32xf32>
    %c16_54 = arith.constant 16 : index
    %c0_55 = arith.constant 0 : index
    %129 = vector.load %arg1[%c16_54, %c0_55] : memref<32x32xf32, #tpu.memory_space<vmem>>, vector<16x32xf32>
    %130 = arith.addf %128, %129 : vector<16x32xf32>
    %c96_56 = arith.constant 96 : index
    %c0_57 = arith.constant 0 : index
    %131 = vector.load %arg2[%c96_56, %c0_57] : memref<416x32xf32, #tpu.memory_space<vmem>>, vector<16x32xf32>
    %c112 = arith.constant 112 : index
    %c0_58 = arith.constant 0 : index
    %132 = vector.load %arg2[%c112, %c0_58] : memref<416x32xf32, #tpu.memory_space<vmem>>, vector<16x32xf32>
    %cst_59 = arith.constant dense<0.000000e+00> : vector<16xf32>
    %133 = vector.multi_reduction <add>, %130, %cst_59 [1] : vector<16x32xf32> to vector<16xf32>
    %134 = vector.shape_cast %133 : vector<16xf32> to vector<16x1xf32>
    %cst_60 = arith.constant 3.200000e+01 : f32
    %135 = vector.broadcast %cst_60 : f32 to vector<16x1xf32>
    %136 = arith.divf %134, %135 : vector<16x1xf32>
    %137 = vector.broadcast %136 : vector<16x1xf32> to vector<16x32xf32>
    %138 = arith.subf %130, %137 : vector<16x32xf32>
    %139 = arith.mulf %138, %138 : vector<16x32xf32>
    %cst_61 = arith.constant dense<0.000000e+00> : vector<16xf32>
    %140 = vector.multi_reduction <add>, %139, %cst_61 [1] : vector<16x32xf32> to vector<16xf32>
    %141 = vector.shape_cast %140 : vector<16xf32> to vector<16x1xf32>
    %cst_62 = arith.constant 3.200000e+01 : f32
    %142 = vector.broadcast %cst_62 : f32 to vector<16x1xf32>
    %143 = arith.divf %141, %142 : vector<16x1xf32>
    %cst_63 = arith.constant 9.99999974E-6 : f32
    %144 = vector.broadcast %cst_63 : f32 to vector<16x1xf32>
    %145 = arith.addf %143, %144 : vector<16x1xf32>
    %146 = math.rsqrt %145 : vector<16x1xf32>
    %147 = vector.broadcast %146 : vector<16x1xf32> to vector<16x32xf32>
    %148 = arith.mulf %138, %147 : vector<16x32xf32>
    %149 = arith.mulf %148, %131 : vector<16x32xf32>
    %150 = arith.addf %149, %132 : vector<16x32xf32>
    %c176 = arith.constant 176 : index
    %c0_64 = arith.constant 0 : index
    %151 = vector.load %arg3[%c176, %c0_64] : memref<352x128xf32, #tpu.memory_space<vmem>>, vector<32x96xf32>
    %cst_65 = arith.constant dense<0.000000e+00> : vector<16x96xf32>
    %152 = tpu.matmul %150, %151, %cst_65 {dimension_numbers = #tpu.dot_dimension_numbers<[1], [0], [0], [1], [0, 0, 1, 1], [], []>} : vector<16x32xf32>, vector<32x96xf32>, vector<16x96xf32> -> vector<16x96xf32>
    %153 = vector.extract_strided_slice %152 {offsets = [0, 0], sizes = [16, 32], strides = [1, 1]} : vector<16x96xf32> to vector<16x32xf32>
    %154 = vector.extract_strided_slice %152 {offsets = [0, 32], sizes = [16, 32], strides = [1, 1]} : vector<16x96xf32> to vector<16x32xf32>
    %155 = vector.extract_strided_slice %152 {offsets = [0, 64], sizes = [16, 32], strides = [1, 1]} : vector<16x96xf32> to vector<16x32xf32>
    %156 = tpu.concatenate %153, %153, %153, %153 in 0 : vector<16x32xf32>, vector<16x32xf32>, vector<16x32xf32>, vector<16x32xf32> -> vector<64x32xf32>
    %157 = arith.mulf %156, %0 : vector<64x32xf32>
    %cst_66 = arith.constant dense<0.000000e+00> : vector<64x16xf32>
    %158 = tpu.matmul %157, %154, %cst_66 {dimension_numbers = #tpu.dot_dimension_numbers<[1], [1], [0], [0], [0, 0, 1, 0], [], []>} : vector<64x32xf32>, vector<16x32xf32>, vector<64x16xf32> -> vector<64x16xf32>
    %159 = arith.addf %158, %2 : vector<64x16xf32>
    %cst_67 = arith.constant dense<0xFF800000> : vector<64xf32>
    %160 = vector.multi_reduction <maximumf>, %159, %cst_67 [1] : vector<64x16xf32> to vector<64xf32>
    %161 = vector.shape_cast %160 : vector<64xf32> to vector<64x1xf32>
    %162 = vector.broadcast %161 : vector<64x1xf32> to vector<64x16xf32>
    %163 = arith.subf %159, %162 : vector<64x16xf32>
    %164 = math.exp %163 : vector<64x16xf32>
    %cst_68 = arith.constant dense<0.000000e+00> : vector<64xf32>
    %165 = vector.multi_reduction <add>, %164, %cst_68 [1] : vector<64x16xf32> to vector<64xf32>
    %166 = vector.shape_cast %165 : vector<64xf32> to vector<64x1xf32>
    %167 = tpu.reciprocal %166 {approx = true} : vector<64x1xf32> -> vector<64x1xf32>
    %168 = vector.broadcast %167 : vector<64x1xf32> to vector<64x16xf32>
    %169 = arith.mulf %164, %168 : vector<64x16xf32>
    %cst_69 = arith.constant dense<0.000000e+00> : vector<64x32xf32>
    %170 = tpu.matmul %169, %155, %cst_69 {dimension_numbers = #tpu.dot_dimension_numbers<[1], [0], [0], [1], [0, 0, 1, 1], [], []>} : vector<64x16xf32>, vector<16x32xf32>, vector<64x32xf32> -> vector<64x32xf32>
    %171 = arith.mulf %170, %1 : vector<64x32xf32>
    %172 = vector.extract_strided_slice %171 {offsets = [0, 0], sizes = [16, 32], strides = [1, 1]} : vector<64x32xf32> to vector<16x32xf32>
    %173 = vector.extract_strided_slice %171 {offsets = [16, 0], sizes = [16, 32], strides = [1, 1]} : vector<64x32xf32> to vector<16x32xf32>
    %174 = arith.addf %172, %173 : vector<16x32xf32>
    %175 = vector.extract_strided_slice %171 {offsets = [32, 0], sizes = [16, 32], strides = [1, 1]} : vector<64x32xf32> to vector<16x32xf32>
    %176 = vector.extract_strided_slice %171 {offsets = [48, 0], sizes = [16, 32], strides = [1, 1]} : vector<64x32xf32> to vector<16x32xf32>
    %177 = arith.addf %175, %176 : vector<16x32xf32>
    %178 = arith.addf %174, %177 : vector<16x32xf32>
    %c208 = arith.constant 208 : index
    %c0_70 = arith.constant 0 : index
    %179 = vector.load %arg3[%c208, %c0_70] : memref<352x128xf32, #tpu.memory_space<vmem>>, vector<32x32xf32>
    %cst_71 = arith.constant dense<0.000000e+00> : vector<16x32xf32>
    %180 = tpu.matmul %178, %179, %cst_71 {dimension_numbers = #tpu.dot_dimension_numbers<[1], [0], [0], [1], [0, 0, 1, 1], [], []>} : vector<16x32xf32>, vector<32x32xf32>, vector<16x32xf32> -> vector<16x32xf32>
    %181 = arith.addf %130, %180 : vector<16x32xf32>
    %c128 = arith.constant 128 : index
    %c0_72 = arith.constant 0 : index
    %182 = vector.load %arg2[%c128, %c0_72] : memref<416x32xf32, #tpu.memory_space<vmem>>, vector<16x32xf32>
    %183 = arith.addf %181, %182 : vector<16x32xf32>
    %c144 = arith.constant 144 : index
    %c0_73 = arith.constant 0 : index
    %184 = vector.load %arg2[%c144, %c0_73] : memref<416x32xf32, #tpu.memory_space<vmem>>, vector<16x32xf32>
    %c160_74 = arith.constant 160 : index
    %c0_75 = arith.constant 0 : index
    %185 = vector.load %arg2[%c160_74, %c0_75] : memref<416x32xf32, #tpu.memory_space<vmem>>, vector<16x32xf32>
    %cst_76 = arith.constant dense<0.000000e+00> : vector<16xf32>
    %186 = vector.multi_reduction <add>, %183, %cst_76 [1] : vector<16x32xf32> to vector<16xf32>
    %187 = vector.shape_cast %186 : vector<16xf32> to vector<16x1xf32>
    %cst_77 = arith.constant 3.200000e+01 : f32
    %188 = vector.broadcast %cst_77 : f32 to vector<16x1xf32>
    %189 = arith.divf %187, %188 : vector<16x1xf32>
    %190 = vector.broadcast %189 : vector<16x1xf32> to vector<16x32xf32>
    %191 = arith.subf %183, %190 : vector<16x32xf32>
    %192 = arith.mulf %191, %191 : vector<16x32xf32>
    %cst_78 = arith.constant dense<0.000000e+00> : vector<16xf32>
    %193 = vector.multi_reduction <add>, %192, %cst_78 [1] : vector<16x32xf32> to vector<16xf32>
    %194 = vector.shape_cast %193 : vector<16xf32> to vector<16x1xf32>
    %cst_79 = arith.constant 3.200000e+01 : f32
    %195 = vector.broadcast %cst_79 : f32 to vector<16x1xf32>
    %196 = arith.divf %194, %195 : vector<16x1xf32>
    %cst_80 = arith.constant 9.99999974E-6 : f32
    %197 = vector.broadcast %cst_80 : f32 to vector<16x1xf32>
    %198 = arith.addf %196, %197 : vector<16x1xf32>
    %199 = math.rsqrt %198 : vector<16x1xf32>
    %200 = vector.broadcast %199 : vector<16x1xf32> to vector<16x32xf32>
    %201 = arith.mulf %191, %200 : vector<16x32xf32>
    %202 = arith.mulf %201, %184 : vector<16x32xf32>
    %203 = arith.addf %202, %185 : vector<16x32xf32>
    %c240 = arith.constant 240 : index
    %c0_81 = arith.constant 0 : index
    %204 = vector.load %arg3[%c240, %c0_81] : memref<352x128xf32, #tpu.memory_space<vmem>>, vector<32x64xf32>
    %cst_82 = arith.constant dense<0.000000e+00> : vector<16x64xf32>
    %205 = tpu.matmul %203, %204, %cst_82 {dimension_numbers = #tpu.dot_dimension_numbers<[1], [0], [0], [1], [0, 0, 1, 1], [], []>} : vector<16x32xf32>, vector<32x64xf32>, vector<16x64xf32> -> vector<16x64xf32>
    %c336 = arith.constant 336 : index
    %c0_83 = arith.constant 0 : index
    %206 = vector.load %arg3[%c336, %c0_83] : memref<352x128xf32, #tpu.memory_space<vmem>>, vector<16x64xf32>
    %207 = arith.addf %205, %206 : vector<16x64xf32>
    %cst_84 = arith.constant 5.000000e-01 : f32
    %208 = vector.broadcast %cst_84 : f32 to vector<16x64xf32>
    %209 = arith.mulf %208, %207 : vector<16x64xf32>
    %cst_85 = arith.constant 0.707106769 : f32
    %210 = vector.broadcast %cst_85 : f32 to vector<16x64xf32>
    %211 = arith.mulf %207, %210 : vector<16x64xf32>
    %cst_86 = arith.constant 0.000000e+00 : f32
    %212 = vector.broadcast %cst_86 : f32 to vector<16x64xf32>
    %213 = arith.cmpf oge, %211, %212 : vector<16x64xf32>
    %cst_87 = arith.constant 1.000000e+00 : f32
    %cst_88 = arith.constant -1.000000e+00 : f32
    %214 = vector.broadcast %cst_87 : f32 to vector<16x64xf32>
    %215 = vector.broadcast %cst_88 : f32 to vector<16x64xf32>
    %216 = arith.select %213, %214, %215 : vector<16x64xi1>, vector<16x64xf32>
    %217 = math.absf %211 : vector<16x64xf32>
    %cst_89 = arith.constant 0.327591091 : f32
    %218 = vector.broadcast %cst_89 : f32 to vector<16x64xf32>
    %219 = arith.mulf %218, %217 : vector<16x64xf32>
    %cst_90 = arith.constant 1.000000e+00 : f32
    %220 = vector.broadcast %cst_90 : f32 to vector<16x64xf32>
    %221 = arith.addf %220, %219 : vector<16x64xf32>
    %cst_91 = arith.constant 1.000000e+00 : f32
    %222 = vector.broadcast %cst_91 : f32 to vector<16x64xf32>
    %223 = arith.divf %222, %221 : vector<16x64xf32>
    %cst_92 = arith.constant 1.06140542 : f32
    %224 = vector.broadcast %cst_92 : f32 to vector<16x64xf32>
    %225 = arith.mulf %224, %223 : vector<16x64xf32>
    %cst_93 = arith.constant -1.45315206 : f32
    %226 = vector.broadcast %cst_93 : f32 to vector<16x64xf32>
    %227 = arith.addf %225, %226 : vector<16x64xf32>
    %228 = arith.mulf %227, %223 : vector<16x64xf32>
    %cst_94 = arith.constant 1.42141378 : f32
    %229 = vector.broadcast %cst_94 : f32 to vector<16x64xf32>
    %230 = arith.addf %228, %229 : vector<16x64xf32>
    %231 = arith.mulf %230, %223 : vector<16x64xf32>
    %cst_95 = arith.constant -0.284496725 : f32
    %232 = vector.broadcast %cst_95 : f32 to vector<16x64xf32>
    %233 = arith.addf %231, %232 : vector<16x64xf32>
    %234 = arith.mulf %233, %223 : vector<16x64xf32>
    %cst_96 = arith.constant 0.254829586 : f32
    %235 = vector.broadcast %cst_96 : f32 to vector<16x64xf32>
    %236 = arith.addf %234, %235 : vector<16x64xf32>
    %237 = arith.mulf %236, %223 : vector<16x64xf32>
    %cst_97 = arith.constant 0.000000e+00 : f32
    %238 = vector.broadcast %cst_97 : f32 to vector<16x64xf32>
    %239 = arith.subf %238, %217 : vector<16x64xf32>
    %240 = arith.mulf %239, %217 : vector<16x64xf32>
    %241 = math.exp %240 : vector<16x64xf32>
    %242 = arith.mulf %237, %241 : vector<16x64xf32>
    %cst_98 = arith.constant 1.000000e+00 : f32
    %243 = vector.broadcast %cst_98 : f32 to vector<16x64xf32>
    %244 = arith.subf %243, %242 : vector<16x64xf32>
    %245 = arith.mulf %216, %244 : vector<16x64xf32>
    %cst_99 = arith.constant 1.000000e+00 : f32
    %246 = vector.broadcast %cst_99 : f32 to vector<16x64xf32>
    %247 = arith.addf %246, %245 : vector<16x64xf32>
    %248 = arith.mulf %209, %247 : vector<16x64xf32>
    %c272 = arith.constant 272 : index
    %c0_100 = arith.constant 0 : index
    %249 = vector.load %arg3[%c272, %c0_100] : memref<352x128xf32, #tpu.memory_space<vmem>>, vector<64x32xf32>
    %cst_101 = arith.constant dense<0.000000e+00> : vector<16x32xf32>
    %250 = tpu.matmul %248, %249, %cst_101 {dimension_numbers = #tpu.dot_dimension_numbers<[1], [0], [0], [1], [0, 0, 1, 1], [], []>} : vector<16x64xf32>, vector<64x32xf32>, vector<16x32xf32> -> vector<16x32xf32>
    %251 = arith.addf %183, %250 : vector<16x32xf32>
    %c176_102 = arith.constant 176 : index
    %c0_103 = arith.constant 0 : index
    %252 = vector.load %arg2[%c176_102, %c0_103] : memref<416x32xf32, #tpu.memory_space<vmem>>, vector<16x32xf32>
    %253 = arith.addf %251, %252 : vector<16x32xf32>
    %c192 = arith.constant 192 : index
    %c0_104 = arith.constant 0 : index
    %254 = vector.load %arg2[%c192, %c0_104] : memref<416x32xf32, #tpu.memory_space<vmem>>, vector<16x32xf32>
    %c208_105 = arith.constant 208 : index
    %c0_106 = arith.constant 0 : index
    %255 = vector.load %arg2[%c208_105, %c0_106] : memref<416x32xf32, #tpu.memory_space<vmem>>, vector<16x32xf32>
    %cst_107 = arith.constant dense<0.000000e+00> : vector<16xf32>
    %256 = vector.multi_reduction <add>, %253, %cst_107 [1] : vector<16x32xf32> to vector<16xf32>
    %257 = vector.shape_cast %256 : vector<16xf32> to vector<16x1xf32>
    %cst_108 = arith.constant 3.200000e+01 : f32
    %258 = vector.broadcast %cst_108 : f32 to vector<16x1xf32>
    %259 = arith.divf %257, %258 : vector<16x1xf32>
    %260 = vector.broadcast %259 : vector<16x1xf32> to vector<16x32xf32>
    %261 = arith.subf %253, %260 : vector<16x32xf32>
    %262 = arith.mulf %261, %261 : vector<16x32xf32>
    %cst_109 = arith.constant dense<0.000000e+00> : vector<16xf32>
    %263 = vector.multi_reduction <add>, %262, %cst_109 [1] : vector<16x32xf32> to vector<16xf32>
    %264 = vector.shape_cast %263 : vector<16xf32> to vector<16x1xf32>
    %cst_110 = arith.constant 3.200000e+01 : f32
    %265 = vector.broadcast %cst_110 : f32 to vector<16x1xf32>
    %266 = arith.divf %264, %265 : vector<16x1xf32>
    %cst_111 = arith.constant 9.99999974E-6 : f32
    %267 = vector.broadcast %cst_111 : f32 to vector<16x1xf32>
    %268 = arith.addf %266, %267 : vector<16x1xf32>
    %269 = math.rsqrt %268 : vector<16x1xf32>
    %270 = vector.broadcast %269 : vector<16x1xf32> to vector<16x32xf32>
    %271 = arith.mulf %261, %270 : vector<16x32xf32>
    %272 = arith.mulf %271, %254 : vector<16x32xf32>
    %273 = arith.addf %272, %255 : vector<16x32xf32>
    %c0_112 = arith.constant 0 : index
    %c0_113 = arith.constant 0 : index
    %274 = vector.load %arg4[%c0_112, %c0_113] : memref<16x32xf32, #tpu.memory_space<vmem>>, vector<16x32xf32>
    tpu.vector_store %arg4[%c0_112, %c0_113], %273 {strides = array<i32>} : memref<16x32xf32, #tpu.memory_space<vmem>>, vector<16x32xf32>,
    return
  }
}

</mosaic_0001>

<llo_original>
// kernel: tpu_custom_call.1
$region0: #{tpu_custom_call.1}
  #allocation0 [shape = 'u32[]', space=smem, size = 0x4, offset = 0x4, fixed_abs, tag = 'smem constant byte address 0x4 - core index']
  #allocation1 [shape = 'u32[72,128]{1,0:T(1,128)}', space=vmem, size = 0x9000, scoped, tag = 'internal scratch']
  %s0 = inlined_call_operand.vmem [shape: f32[16,32], index: 0, kind: input, shape index: {}]
  %s1 = inlined_call_operand.vmem [shape: f32[32,32], index: 1, kind: input, shape index: {}]
  %s2 = inlined_call_operand.vmem [shape: f32[416,32], index: 2, kind: input, shape index: {}]
  %s3 = inlined_call_operand.vmem [shape: f32[352,128], index: 3, kind: input, shape index: {}]
  %s4 = inlined_call_operand.hbm [shape: f32[16,32], index: 4, kind: output, shape index: {}]
  %s5 = sld [smem:[#allocation0]]
  $region26: #{tpu_custom_call.1} parent=0
    _
  %s7 = ssub.s32 1, %s5
  %s8 = scalar_select 0, %s7, %s5
  $region1: #{tpu_custom_call.1} parent=0
    #allocation2 [shape = 'u8[8192]{0}', space=vmem, size = 0x2000, scoped, tag = 'output window, operand 0, single buffered']
    #allocation3 [shape = 's32[1]{0}', space=sflag, size = 0x4, scoped, tag = 'scoped memory for tpu_custom_call.1']
    %9 = vsyncpa [#allocation3], 0
    // Predicated region
    $region2: #{tpu_custom_call.1} parent=1 // pred_check
      _
    $region3: #{tpu_custom_call.1} parent=1 // pred_check_branch
      %11 = sbr.rel (0) target = $region5
    $region4: #{tpu_custom_call.1} parent=1 // pred_region
      _
    $region5: #{tpu_custom_call.1} parent=1 // pred_fallthru
      _
    // Predicated region
    $region6: #{tpu_custom_call.1} parent=1 // pred_check
      _
    $region7: #{tpu_custom_call.1} parent=1 // pred_check_branch
      %13 = sbr.rel (0) target = $region9
    $region8: #{tpu_custom_call.1} parent=1 // pred_region
      _
    $region9: #{tpu_custom_call.1} parent=1 // pred_fallthru
      _
    // Predicated region
    $region10: #{tpu_custom_call.1} parent=1 // pred_check
      _
    $region11: #{tpu_custom_call.1} parent=1 // pred_check_branch
      %15 = sbr.rel (0) target = $region13
    $region12: #{tpu_custom_call.1} parent=1 // pred_region
      _
    $region13: #{tpu_custom_call.1} parent=1 // pred_fallthru
      _
    // Predicated region
    $region14: #{tpu_custom_call.1} parent=1 // pred_check
      _
    $region15: #{tpu_custom_call.1} parent=1 // pred_check_branch
      %17 = sbr.rel (0) target = $region17
    $region16: #{tpu_custom_call.1} parent=1 // pred_region
      _
    $region17: #{tpu_custom_call.1} parent=1 // pred_fallthru
      _
    %v18 = vld [vmem:[%s2 + $0xe0] sm:$0xff]
    %v19 = vld [vmem:[%s2 + $0xe8] sm:$0xff]
    %v20 = vld [vmem:[%s2 + $0xf0] sm:$0xff]
    %v21 = vld [vmem:[%s2 + $0xf8] sm:$0xff]
    %v22 = vld [vmem:[%s2 + $0x100] sm:$0xff]
    %v23 = vld [vmem:[%s2 + $0x108] sm:$0xff]
    %v24 = vld [vmem:[%s2 + $0x110] sm:$0xff]
    %v25 = vld [vmem:[%s2 + $0x118] sm:$0xff]
    %v26 = vld [vmem:[%s2 + $0x120] sm:$0xff]
    %v27 = vld [vmem:[%s2 + $0x128] sm:$0xff]
    %v28 = vld [vmem:[%s2 + $0x130] sm:$0xff]
    %v29 = vld [vmem:[%s2 + $0x138] sm:$0xff]
    %v30 = vld [vmem:[%s2 + $0x140] sm:$0xff]
    %v31 = vld [vmem:[%s2 + $0x148] sm:$0xff]
    %v32 = vld [vmem:[%s2 + $0x150] sm:$0xff]
    %v33 = vld [vmem:[%s2 + $0x158] sm:$0xff]
    %v34 = vld [vmem:[%s2 + $0x160] sm:$0xff]
    %v35 = vld [vmem:[%s2 + $0x168] sm:$0xff]
    %v36 = vld [vmem:[%s2 + $0x170] sm:$0xff]
    %v37 = vld [vmem:[%s2 + $0x178] sm:$0xff]
    %v38 = vld [vmem:[%s2 + $0x180] sm:$0xff]
    %v39 = vld [vmem:[%s2 + $0x188] sm:$0xff]
    %v40 = vld [vmem:[%s2 + $0x190] sm:$0xff]
    %v41 = vld [vmem:[%s2 + $0x198] sm:$0xff]
    %v42 = vld [vmem:[%s0] sm:$0xff]
    %v43 = vld [vmem:[%s0 + $0x8] sm:$0xff]
    %v44 = vld [vmem:[%s1] sm:$0xff]
    %v45 = vld [vmem:[%s1 + $0x8] sm:$0xff]
    %v46 = vadd.f32 %v42, %v44
    %v47 = vadd.f32 %v43, %v45
    %v48 = vld [vmem:[%s2] sm:$0xff]
    %v49 = vld [vmem:[%s2 + $0x8] sm:$0xff]
    %v50 = vld [vmem:[%s2 + $0x10] sm:$0xff]
    %v51 = vld [vmem:[%s2 + $0x18] sm:$0xff]
    %vm52 = vcmask 261120
    %v53 = vsel %vm52, %v46, 0.0
    %54 = vadd.xlane.f32.xlu0 %v53
    %v55 = vpop.xlane.xlu0 %54
    %v56 = vsel %vm52, %v47, 0.0
    %57 = vadd.xlane.f32.xlu0 %v56
    %v58 = vpop.xlane.xlu0 %57
    %v59 = vrcp.pop 32.0
    %v60 = vmul.f32 32.0, %v59
    %v61 = vsub.f32 1.0, %v60
    %v62 = vmul.f32 %v59, %v61
    %v63 = vadd.f32 %v59, %v62
    %vm64 = vweird.f32 %v59
    %v65 = vsel %vm64, %v59, %v63
    %v66 = vmul.f32 %v55, %v65
    %v67 = vmul.f32 %v58, %v65
    %v68 = vsub.f32 %v46, %v66
    %v69 = vsub.f32 %v47, %v67
    %v70 = vmul.f32 %v68, %v68
    %v71 = vmul.f32 %v69, %v69
    %v72 = vsel %vm52, %v70, 0.0
    %73 = vadd.xlane.f32.xlu0 %v72
    %v74 = vpop.xlane.xlu0 %73
    %v75 = vsel %vm52, %v71, 0.0
    %76 = vadd.xlane.f32.xlu0 %v75
    %v77 = vpop.xlane.xlu0 %76
    %v78 = vmul.f32 %v74, %v65
    %v79 = vmul.f32 %v77, %v65
    %v80 = vadd.f32 %v78, 1e-05
    %v81 = vadd.f32 %v79, 1e-05
    %v82 = vrsqrt.pop %v80
    %v83 = vmul.f32 %v82, %v80
    %v84 = vmul.f32 %v83, %v82
    %v85 = vmul.f32 0.5, %v84
    %v86 = vsub.f32 1.5, %v85
    %v87 = vmul.f32 %v82, %v86
    %vm88 = vweird.f32 %v80
    %vm89 = vweird.f32 %v82
    %vm90 = vmor %vm88, %vm89
    %v91 = vsel %vm90, %v82, %v87
    %v92 = vrsqrt.pop %v81
    %v93 = vmul.f32 %v92, %v81
    %v94 = vmul.f32 %v93, %v92
    %v95 = vmul.f32 0.5, %v94
    %v96 = vsub.f32 1.5, %v95
    %v97 = vmul.f32 %v92, %v96
    %vm98 = vweird.f32 %v81
    %vm99 = vweird.f32 %v92
    %vm100 = vmor %vm98, %vm99
    %v101 = vsel %vm100, %v92, %v97
    %v102 = vmul.f32 %v68, %v91
    %v103 = vmul.f32 %v69, %v101
    %v104 = vmul.f32 %v102, %v48
    %v105 = vmul.f32 %v103, %v49
    %v106 = vadd.f32 %v104, %v50
    %v107 = vadd.f32 %v105, %v51
    %v108 = vld [vmem:[%s3] sm:$0xff]
    %v109 = vld [vmem:[%s3 + $0x8] sm:$0xff]
    %v110 = vld [vmem:[%s3 + $0x10] sm:$0xff]
    %v111 = vld [vmem:[%s3 + $0x18] sm:$0xff]
    %v113 = vsel %vm52, %v106, 0
    %v116 = vsel %vm52, %v107, 0
    %118 = vmatpush.msra.mxu0 0.0
    %119 = vmatpush.msra.mxu0 0.0
    %120 = vmatpush.msra.mxu0 0.0
    %121 = vmatpush.msra.mxu0 0.0
    %122 = vmatpush.msra.mxu0 0.0
    %123 = vmatpush.msra.mxu0 0.0
    %124 = vmatpush.msra.mxu0 0.0
    %125 = vmatpush.msra.mxu0 0.0
    %126 = vmatpush.msra.mxu0 0.0
    %127 = vmatpush.msra.mxu0 0.0
    %128 = vmatpush.msra.mxu0 0.0
    %129 = vmatpush.msra.mxu0 0.0
    %130 = vmatpush.msra.mxu0 %v111
    %131 = vmatpush.msra.mxu0 %v110
    %132 = vmatpush.msra.mxu0 %v109
    %133 = vmatpush.msra.mxu0 %v108
    %134 = vmatmul.f32.gmra.mxu0 %v113
    %v135 = vpop.f32.mrf.mxu0
    %v136 = vadd.f32 0.0, %v135
    %137 = vmatmul.f32.gmra.mxu0 %v116
    %v138 = vpop.f32.mrf.mxu0
    %v139 = vadd.f32 0.0, %v138
    %140 = vdwg.mxu0
    %v141 = vmul.f32 %v136, %v18
    %v142 = vmul.f32 %v139, %v19
    %v143 = vmul.f32 %v136, %v20
    %v144 = vmul.f32 %v139, %v21
    %v145 = vmul.f32 %v136, %v22
    %v146 = vmul.f32 %v139, %v23
    %v147 = vmul.f32 %v136, %v24
    %v148 = vmul.f32 %v139, %v25
    %151 = vrot.lane.b32.xlu0 %v136, 96
    %v152 = vpop.permute.xlu0 %151
    %153 = vrot.lane.b32.xlu0 %v139, 96
    %v154 = vpop.permute.xlu0 %153
    %v156 = vsel %vm52, %v141, 0
    %v159 = vsel %vm52, %v142, 0
    %v162 = vsel %vm52, %v143, 0
    %v165 = vsel %vm52, %v144, 0
    %v168 = vsel %vm52, %v145, 0
    %v171 = vsel %vm52, %v146, 0
    %v174 = vsel %vm52, %v147, 0
    %v177 = vsel %vm52, %v148, 0
    %v179 = vsel %vm52, %v152, 0
    %v181 = vsel %vm52, %v154, 0
    %183 = vmatpush.xpose.msra.mxu0 0.0
    %184 = vmatpush.xpose.msra.mxu0 0.0
    %185 = vmatpush.xpose.msra.mxu0 0.0
    %186 = vmatpush.xpose.msra.mxu0 0.0
    %187 = vmatpush.xpose.msra.mxu0 0.0
    %188 = vmatpush.xpose.msra.mxu0 0.0
    %189 = vmatpush.xpose.msra.mxu0 0.0
    %190 = vmatpush.xpose.msra.mxu0 0.0
    %191 = vmatpush.xpose.msra.mxu0 0.0
    %192 = vmatpush.xpose.msra.mxu0 0.0
    %193 = vmatpush.xpose.msra.mxu0 0.0
    %194 = vmatpush.xpose.msra.mxu0 0.0
    %195 = vmatpush.xpose.msra.mxu0 0.0
    %196 = vmatpush.xpose.msra.mxu0 0.0
    %197 = vmatpush.xpose.msra.mxu0 %v181
    %198 = vmatpush.xpose.msra.mxu0 %v179
    %199 = vmatmul.f32.gmra.mxu0 %v156
    %v200 = vpop.f32.mrf.mxu0
    %v201 = vadd.f32 %v34, %v200
    %202 = vmatmul.f32.gmra.mxu0 %v159
    %v203 = vpop.f32.mrf.mxu0
    %v204 = vadd.f32 %v35, %v203
    %205 = vmatmul.f32.gmra.mxu0 %v162
    %v206 = vpop.f32.mrf.mxu0
    %v207 = vadd.f32 %v36, %v206
    %208 = vmatmul.f32.gmra.mxu0 %v165
    %v209 = vpop.f32.mrf.mxu0
    %v210 = vadd.f32 %v37, %v209
    %211 = vmatmul.f32.gmra.mxu0 %v168
    %v212 = vpop.f32.mrf.mxu0
    %v213 = vadd.f32 %v38, %v212
    %214 = vmatmul.f32.gmra.mxu0 %v171
    %v215 = vpop.f32.mrf.mxu0
    %v216 = vadd.f32 %v39, %v215
    %217 = vmatmul.f32.gmra.mxu0 %v174
    %v218 = vpop.f32.mrf.mxu0
    %v219 = vadd.f32 %v40, %v218
    %220 = vmatmul.f32.gmra.mxu0 %v177
    %v221 = vpop.f32.mrf.mxu0
    %v222 = vadd.f32 %v41, %v221
    %223 = vdwg.mxu0
    %vm224 = vcmask 130048
    %v225 = vsel %vm224, %v201, -inf
    %226 = vmax.xlane.f32.xlu0 %v225
    %v227 = vpop.xlane.xlu0 %226
    %v228 = vsel %vm224, %v204, -inf
    %229 = vmax.xlane.f32.xlu0 %v228
    %v230 = vpop.xlane.xlu0 %229
    %v231 = vsel %vm224, %v207, -inf
    %232 = vmax.xlane.f32.xlu0 %v231
    %v233 = vpop.xlane.xlu0 %232
    %v234 = vsel %vm224, %v210, -inf
    %235 = vmax.xlane.f32.xlu0 %v234
    %v236 = vpop.xlane.xlu0 %235
    %v237 = vsel %vm224, %v213, -inf
    %238 = vmax.xlane.f32.xlu0 %v237
    %v239 = vpop.xlane.xlu0 %238
    %v240 = vsel %vm224, %v216, -inf
    %241 = vmax.xlane.f32.xlu0 %v240
    %v242 = vpop.xlane.xlu0 %241
    %v243 = vsel %vm224, %v219, -inf
    %244 = vmax.xlane.f32.xlu0 %v243
    %v245 = vpop.xlane.xlu0 %244
    %v246 = vsel %vm224, %v222, -inf
    %247 = vmax.xlane.f32.xlu0 %v246
    %v248 = vpop.xlane.xlu0 %247
    %v249 = vsub.f32 %v201, %v227
    %v250 = vsub.f32 %v204, %v230
    %v251 = vsub.f32 %v207, %v233
    %v252 = vsub.f32 %v210, %v236
    %v253 = vsub.f32 %v213, %v239
    %v254 = vsub.f32 %v216, %v242
    %v255 = vsub.f32 %v219, %v245
    %v256 = vsub.f32 %v222, %v248
    %v257 = vmul.f32 %v249, 1.442695
    %v258 = vpow.pop %v257
    %v259 = vmul.f32 %v250, 1.442695
    %v260 = vpow.pop %v259
    %v261 = vmul.f32 %v251, 1.442695
    %v262 = vpow.pop %v261
    %v263 = vmul.f32 %v252, 1.442695
    %v264 = vpow.pop %v263
    %v265 = vmul.f32 %v253, 1.442695
    %v266 = vpow.pop %v265
    %v267 = vmul.f32 %v254, 1.442695
    %v268 = vpow.pop %v267
    %v269 = vmul.f32 %v255, 1.442695
    %v270 = vpow.pop %v269
    %v271 = vmul.f32 %v256, 1.442695
    %v272 = vpow.pop %v271
    %v273 = vsel %vm224, %v258, 0.0
    %274 = vadd.xlane.f32.xlu0 %v273
    %v275 = vpop.xlane.xlu0 %274
    %v276 = vsel %vm224, %v260, 0.0
    %277 = vadd.xlane.f32.xlu0 %v276
    %v278 = vpop.xlane.xlu0 %277
    %v279 = vsel %vm224, %v262, 0.0
    %280 = vadd.xlane.f32.xlu0 %v279
    %v281 = vpop.xlane.xlu0 %280
    %v282 = vsel %vm224, %v264, 0.0
    %283 = vadd.xlane.f32.xlu0 %v282
    %v284 = vpop.xlane.xlu0 %283
    %v285 = vsel %vm224, %v266, 0.0
    %286 = vadd.xlane.f32.xlu0 %v285
    %v287 = vpop.xlane.xlu0 %286
    %v288 = vsel %vm224, %v268, 0.0
    %289 = vadd.xlane.f32.xlu0 %v288
    %v290 = vpop.xlane.xlu0 %289
    %v291 = vsel %vm224, %v270, 0.0
    %292 = vadd.xlane.f32.xlu0 %v291
    %v293 = vpop.xlane.xlu0 %292
    %v294 = vsel %vm224, %v272, 0.0
    %295 = vadd.xlane.f32.xlu0 %v294
    %v296 = vpop.xlane.xlu0 %295
    %v297 = vrcp.pop %v275
    %v298 = vrcp.pop %v278
    %v299 = vrcp.pop %v281
    %v300 = vrcp.pop %v284
    %v301 = vrcp.pop %v287
    %v302 = vrcp.pop %v290
    %v303 = vrcp.pop %v293
    %v304 = vrcp.pop %v296
    %v305 = vmul.f32 %v258, %v297
    %v306 = vmul.f32 %v260, %v298
    %v307 = vmul.f32 %v262, %v299
    %v308 = vmul.f32 %v264, %v300
    %v309 = vmul.f32 %v266, %v301
    %v310 = vmul.f32 %v268, %v302
    %v311 = vmul.f32 %v270, %v303
    %v312 = vmul.f32 %v272, %v304
    %313 = vrot.lane.b32.xlu0 %v136, 64
    %v314 = vpop.permute.xlu0 %313
    %315 = vrot.lane.b32.xlu0 %v139, 64
    %v316 = vpop.permute.xlu0 %315
    %v320 = vsel %vm224, %v305, 0
    %v323 = vsel %vm224, %v306, 0
    %v326 = vsel %vm224, %v307, 0
    %v329 = vsel %vm224, %v308, 0
    %v332 = vsel %vm224, %v309, 0
    %v335 = vsel %vm224, %v310, 0
    %v338 = vsel %vm224, %v311, 0
    %v341 = vsel %vm224, %v312, 0
    %343 = vmatpush.msra.mxu0 0.0
    %344 = vmatpush.msra.mxu0 0.0
    %345 = vmatpush.msra.mxu0 0.0
    %346 = vmatpush.msra.mxu0 0.0
    %347 = vmatpush.msra.mxu0 0.0
    %348 = vmatpush.msra.mxu0 0.0
    %349 = vmatpush.msra.mxu0 0.0
    %350 = vmatpush.msra.mxu0 0.0
    %351 = vmatpush.msra.mxu0 0.0
    %352 = vmatpush.msra.mxu0 0.0
    %353 = vmatpush.msra.mxu0 0.0
    %354 = vmatpush.msra.mxu0 0.0
    %355 = vmatpush.msra.mxu0 0.0
    %356 = vmatpush.msra.mxu0 0.0
    %357 = vmatpush.msra.mxu0 %v316
    %358 = vmatpush.msra.mxu0 %v314
    %359 = vmatmul.f32.gmra.mxu0 %v320
    %v360 = vpop.f32.mrf.mxu0
    %v361 = vadd.f32 0.0, %v360
    %362 = vmatmul.f32.gmra.mxu0 %v323
    %v363 = vpop.f32.mrf.mxu0
    %v364 = vadd.f32 0.0, %v363
    %365 = vmatmul.f32.gmra.mxu0 %v326
    %v366 = vpop.f32.mrf.mxu0
    %v367 = vadd.f32 0.0, %v366
    %368 = vmatmul.f32.gmra.mxu0 %v329
    %v369 = vpop.f32.mrf.mxu0
    %v370 = vadd.f32 0.0, %v369
    %371 = vmatmul.f32.gmra.mxu0 %v332
    %v372 = vpop.f32.mrf.mxu0
    %v373 = vadd.f32 0.0, %v372
    %374 = vmatmul.f32.gmra.mxu0 %v335
    %v375 = vpop.f32.mrf.mxu0
    %v376 = vadd.f32 0.0, %v375
    %377 = vmatmul.f32.gmra.mxu0 %v338
    %v378 = vpop.f32.mrf.mxu0
    %v379 = vadd.f32 0.0, %v378
    %380 = vmatmul.f32.gmra.mxu0 %v341
    %v381 = vpop.f32.mrf.mxu0
    %v382 = vadd.f32 0.0, %v381
    %383 = vdwg.mxu0
    %v384 = vmul.f32 %v361, %v26
    %v385 = vmul.f32 %v364, %v27
    %v386 = vmul.f32 %v367, %v28
    %v387 = vmul.f32 %v370, %v29
    %v388 = vmul.f32 %v373, %v30
    %v389 = vmul.f32 %v376, %v31
    %v390 = vmul.f32 %v379, %v32
    %v391 = vmul.f32 %v382, %v33
    %v392 = vadd.f32 %v384, %v386
    %v393 = vadd.f32 %v385, %v387
    %v394 = vadd.f32 %v388, %v390
    %v395 = vadd.f32 %v389, %v391
    %v396 = vadd.f32 %v392, %v394
    %v397 = vadd.f32 %v393, %v395
    %v398 = vld [vmem:[%s3 + $0x20] sm:$0xff]
    %v399 = vld [vmem:[%s3 + $0x28] sm:$0xff]
    %v400 = vld [vmem:[%s3 + $0x30] sm:$0xff]
    %v401 = vld [vmem:[%s3 + $0x38] sm:$0xff]
    %v403 = vsel %vm52, %v396, 0
    %v406 = vsel %vm52, %v397, 0
    %408 = vmatpush.msra.mxu0 0.0
    %409 = vmatpush.msra.mxu0 0.0
    %410 = vmatpush.msra.mxu0 0.0
    %411 = vmatpush.msra.mxu0 0.0
    %412 = vmatpush.msra.mxu0 0.0
    %413 = vmatpush.msra.mxu0 0.0
    %414 = vmatpush.msra.mxu0 0.0
    %415 = vmatpush.msra.mxu0 0.0
    %416 = vmatpush.msra.mxu0 0.0
    %417 = vmatpush.msra.mxu0 0.0
    %418 = vmatpush.msra.mxu0 0.0
    %419 = vmatpush.msra.mxu0 0.0
    %420 = vmatpush.msra.mxu0 %v401
    %421 = vmatpush.msra.mxu0 %v400
    %422 = vmatpush.msra.mxu0 %v399
    %423 = vmatpush.msra.mxu0 %v398
    %424 = vmatmul.f32.gmra.mxu0 %v403
    %v425 = vpop.f32.mrf.mxu0
    %v426 = vadd.f32 0.0, %v425
    %427 = vmatmul.f32.gmra.mxu0 %v406
    %v428 = vpop.f32.mrf.mxu0
    %v429 = vadd.f32 0.0, %v428
    %430 = vdwg.mxu0
    %v431 = vadd.f32 %v46, %v426
    %v432 = vadd.f32 %v47, %v429
    %v433 = vld [vmem:[%s2 + $0x20] sm:$0xff]
    %v434 = vld [vmem:[%s2 + $0x28] sm:$0xff]
    %v435 = vadd.f32 %v431, %v433
    %v436 = vadd.f32 %v432, %v434
    %v437 = vld [vmem:[%s2 + $0x30] sm:$0xff]
    %v438 = vld [vmem:[%s2 + $0x38] sm:$0xff]
    %v439 = vld [vmem:[%s2 + $0x40] sm:$0xff]
    %v440 = vld [vmem:[%s2 + $0x48] sm:$0xff]
    %v441 = vsel %vm52, %v435, 0.0
    %442 = vadd.xlane.f32.xlu0 %v441
    %v443 = vpop.xlane.xlu0 %442
    %v444 = vsel %vm52, %v436, 0.0
    %445 = vadd.xlane.f32.xlu0 %v444
    %v446 = vpop.xlane.xlu0 %445
    %v447 = vmul.f32 %v443, %v65
    %v448 = vmul.f32 %v446, %v65
    %v449 = vsub.f32 %v435, %v447
    %v450 = vsub.f32 %v436, %v448
    %v451 = vmul.f32 %v449, %v449
    %v452 = vmul.f32 %v450, %v450
    %v453 = vsel %vm52, %v451, 0.0
    %454 = vadd.xlane.f32.xlu0 %v453
    %v455 = vpop.xlane.xlu0 %454
    %v456 = vsel %vm52, %v452, 0.0
    %457 = vadd.xlane.f32.xlu0 %v456
    %v458 = vpop.xlane.xlu0 %457
    %v459 = vmul.f32 %v455, %v65
    %v460 = vmul.f32 %v458, %v65
    %v461 = vadd.f32 %v459, 1e-05
    %v462 = vadd.f32 %v460, 1e-05
    %v463 = vrsqrt.pop %v461
    %v464 = vmul.f32 %v463, %v461
    %v465 = vmul.f32 %v464, %v463
    %v466 = vmul.f32 0.5, %v465
    %v467 = vsub.f32 1.5, %v466
    %v468 = vmul.f32 %v463, %v467
    %vm469 = vweird.f32 %v461
    %vm470 = vweird.f32 %v463
    %vm471 = vmor %vm469, %vm470
    %v472 = vsel %vm471, %v463, %v468
    %v473 = vrsqrt.pop %v462
    %v474 = vmul.f32 %v473, %v462
    %v475 = vmul.f32 %v474, %v473
    %v476 = vmul.f32 0.5, %v475
    %v477 = vsub.f32 1.5, %v476
    %v478 = vmul.f32 %v473, %v477
    %vm479 = vweird.f32 %v462
    %vm480 = vweird.f32 %v473
    %vm481 = vmor %vm479, %vm480
    %v482 = vsel %vm481, %v473, %v478
    %v483 = vmul.f32 %v449, %v472
    %v484 = vmul.f32 %v450, %v482
    %v485 = vmul.f32 %v483, %v437
    %v486 = vmul.f32 %v484, %v438
    %v487 = vadd.f32 %v485, %v439
    %v488 = vadd.f32 %v486, %v440
    %v489 = vld [vmem:[%s3 + $0x40] sm:$0xff]
    %v490 = vld [vmem:[%s3 + $0x48] sm:$0xff]
    %v491 = vld [vmem:[%s3 + $0x50] sm:$0xff]
    %v492 = vld [vmem:[%s3 + $0x58] sm:$0xff]
    %v493 = vld [vmem:[%s3 + $0xa0] sm:$0xff]
    %v494 = vld [vmem:[%s3 + $0xa8] sm:$0xff]
    %v496 = vsel %vm52, %v487, 0
    %v499 = vsel %vm52, %v488, 0
    %501 = vmatpush.msra.mxu0 0.0
    %502 = vmatpush.msra.mxu0 0.0
    %503 = vmatpush.msra.mxu0 0.0
    %504 = vmatpush.msra.mxu0 0.0
    %505 = vmatpush.msra.mxu0 0.0
    %506 = vmatpush.msra.mxu0 0.0
    %507 = vmatpush.msra.mxu0 0.0
    %508 = vmatpush.msra.mxu0 0.0
    %509 = vmatpush.msra.mxu0 0.0
    %510 = vmatpush.msra.mxu0 0.0
    %511 = vmatpush.msra.mxu0 0.0
    %512 = vmatpush.msra.mxu0 0.0
    %513 = vmatpush.msra.mxu0 %v492
    %514 = vmatpush.msra.mxu0 %v491
    %515 = vmatpush.msra.mxu0 %v490
    %516 = vmatpush.msra.mxu0 %v489
    %517 = vmatmul.f32.gmra.mxu0 %v496
    %v518 = vpop.f32.mrf.mxu0
    %v519 = vadd.f32 %v493, %v518
    %520 = vmatmul.f32.gmra.mxu0 %v499
    %v521 = vpop.f32.mrf.mxu0
    %v522 = vadd.f32 %v494, %v521
    %523 = vdwg.mxu0
    %v524 = vmul.f32 %v519, 0.5
    %v525 = vmul.f32 %v522, 0.5
    %v526 = vmul.f32 %v519, 0.70710677
    %v527 = vmul.f32 %v522, 0.70710677
    %vm528 = vcmp.ge.f32.partialorder %v526, 0.0
    %vm529 = vcmp.ge.f32.partialorder %v527, 0.0
    %v530 = vsel %vm528, 1.0, -1.0
    %v531 = vsel %vm529, 1.0, -1.0
    %v532 = vand.u32 2147483647, %v526
    %v533 = vand.u32 2147483647, %v527
    %v534 = vmul.f32 %v532, 0.3275911
    %v535 = vmul.f32 %v533, 0.3275911
    %v536 = vadd.f32 %v534, 1.0
    %v537 = vadd.f32 %v535, 1.0
    %v538 = vrcp.pop %v536
    %v539 = vmul.f32 %v536, %v538
    %v540 = vsub.f32 1.0, %v539
    %v541 = vmul.f32 %v538, %v540
    %v542 = vadd.f32 %v538, %v541
    %vm543 = vweird.f32 %v536
    %vm544 = vweird.f32 %v538
    %vm545 = vmor %vm543, %vm544
    %v546 = vsel %vm545, %v538, %v542
    %v547 = vand.u32 2147483647, %v536
    %vm548 = vcmp.eq.f32.partialorder %v547, 8.507059e+37
    %v549 = vand.u32 %v536, 2147483648
    %v550 = vor.u32 1.1754944e-38, %v549
    %v551 = vsel %vm548, %v550, %v546
    %v552 = vmul.f32 1.0, %v551
    %v553 = vrcp.pop %v537
    %v554 = vmul.f32 %v537, %v553
    %v555 = vsub.f32 1.0, %v554
    %v556 = vmul.f32 %v553, %v555
    %v557 = vadd.f32 %v553, %v556
    %vm558 = vweird.f32 %v537
    %vm559 = vweird.f32 %v553
    %vm560 = vmor %vm558, %vm559
    %v561 = vsel %vm560, %v553, %v557
    %v562 = vand.u32 2147483647, %v537
    %vm563 = vcmp.eq.f32.partialorder %v562, 8.507059e+37
    %v564 = vand.u32 %v537, 2147483648
    %v565 = vor.u32 1.1754944e-38, %v564
    %v566 = vsel %vm563, %v565, %v561
    %v567 = vmul.f32 1.0, %v566
    %v568 = vmul.f32 %v552, 1.0614054
    %v569 = vmul.f32 %v567, 1.0614054
    %v570 = vadd.f32 %v568, -1.4531521
    %v571 = vadd.f32 %v569, -1.4531521
    %v572 = vmul.f32 %v570, %v552
    %v573 = vmul.f32 %v571, %v567
    %v574 = vadd.f32 %v572, 1.4214138
    %v575 = vadd.f32 %v573, 1.4214138
    %v576 = vmul.f32 %v574, %v552
    %v577 = vmul.f32 %v575, %v567
    %v578 = vadd.f32 %v576, -0.28449672
    %v579 = vadd.f32 %v577, -0.28449672
    %v580 = vmul.f32 %v578, %v552
    %v581 = vmul.f32 %v579, %v567
    %v582 = vadd.f32 %v580, 0.2548296
    %v583 = vadd.f32 %v581, 0.2548296
    %v584 = vmul.f32 %v582, %v552
    %v585 = vmul.f32 %v583, %v567
    %v586 = vsub.f32 0.0, %v532
    %v587 = vsub.f32 0.0, %v533
    %v588 = vmul.f32 %v586, %v532
    %v589 = vmul.f32 %v587, %v533
    %v590 = vmul.f32 %v588, 1.442695
    %v591 = vpow.pop %v590
    %v592 = vmul.f32 %v589, 1.442695
    %v593 = vpow.pop %v592
    %v594 = vmul.f32 %v584, %v591
    %v595 = vmul.f32 %v585, %v593
    %v596 = vsub.f32 1.0, %v594
    %v597 = vsub.f32 1.0, %v595
    %v598 = vmul.f32 %v530, %v596
    %v599 = vmul.f32 %v531, %v597
    %v600 = vadd.f32 %v598, 1.0
    %v601 = vadd.f32 %v599, 1.0
    %v602 = vmul.f32 %v524, %v600
    %v603 = vmul.f32 %v525, %v601
    %v604 = vld [vmem:[%s3 + $0x60] sm:$0xff]
    %v605 = vld [vmem:[%s3 + $0x68] sm:$0xff]
    %v606 = vld [vmem:[%s3 + $0x70] sm:$0xff]
    %v607 = vld [vmem:[%s3 + $0x78] sm:$0xff]
    %v608 = vld [vmem:[%s3 + $0x80] sm:$0xff]
    %v609 = vld [vmem:[%s3 + $0x88] sm:$0xff]
    %v610 = vld [vmem:[%s3 + $0x90] sm:$0xff]
    %v611 = vld [vmem:[%s3 + $0x98] sm:$0xff]
    %vm612 = vcmask 523264
    %v614 = vsel %vm612, %v602, 0
    %v617 = vsel %vm612, %v603, 0
    %619 = vmatpush.msra.mxu0 0.0
    %620 = vmatpush.msra.mxu0 0.0
    %621 = vmatpush.msra.mxu0 0.0
    %622 = vmatpush.msra.mxu0 0.0
    %623 = vmatpush.msra.mxu0 0.0
    %624 = vmatpush.msra.mxu0 0.0
    %625 = vmatpush.msra.mxu0 0.0
    %626 = vmatpush.msra.mxu0 0.0
    %627 = vmatpush.msra.mxu0 %v611
    %628 = vmatpush.msra.mxu0 %v610
    %629 = vmatpush.msra.mxu0 %v609
    %630 = vmatpush.msra.mxu0 %v608
    %631 = vmatpush.msra.mxu0 %v607
    %632 = vmatpush.msra.mxu0 %v606
    %633 = vmatpush.msra.mxu0 %v605
    %634 = vmatpush.msra.mxu0 %v604
    %635 = vmatmul.f32.gmra.mxu0 %v614
    %v636 = vpop.f32.mrf.mxu0
    %v637 = vadd.f32 0.0, %v636
    %638 = vmatmul.f32.gmra.mxu0 %v617
    %v639 = vpop.f32.mrf.mxu0
    %v640 = vadd.f32 0.0, %v639
    %641 = vdwg.mxu0
    %v642 = vadd.f32 %v435, %v637
    %v643 = vadd.f32 %v436, %v640
    %v644 = vld [vmem:[%s2 + $0x50] sm:$0xff]
    %v645 = vld [vmem:[%s2 + $0x58] sm:$0xff]
    %v646 = vadd.f32 %v642, %v644
    %v647 = vadd.f32 %v643, %v645
    %v648 = vld [vmem:[%s1 + $0x10] sm:$0xff]
    %v649 = vld [vmem:[%s1 + $0x18] sm:$0xff]
    %v650 = vadd.f32 %v646, %v648
    %v651 = vadd.f32 %v647, %v649
    %v652 = vld [vmem:[%s2 + $0x60] sm:$0xff]
    %v653 = vld [vmem:[%s2 + $0x68] sm:$0xff]
    %v654 = vld [vmem:[%s2 + $0x70] sm:$0xff]
    %v655 = vld [vmem:[%s2 + $0x78] sm:$0xff]
    %v656 = vsel %vm52, %v650, 0.0
    %657 = vadd.xlane.f32.xlu0 %v656
    %v658 = vpop.xlane.xlu0 %657
    %v659 = vsel %vm52, %v651, 0.0
    %660 = vadd.xlane.f32.xlu0 %v659
    %v661 = vpop.xlane.xlu0 %660
    %v662 = vmul.f32 %v658, %v65
    %v663 = vmul.f32 %v661, %v65
    %v664 = vsub.f32 %v650, %v662
    %v665 = vsub.f32 %v651, %v663
    %v666 = vmul.f32 %v664, %v664
    %v667 = vmul.f32 %v665, %v665
    %v668 = vsel %vm52, %v666, 0.0
    %669 = vadd.xlane.f32.xlu0 %v668
    %v670 = vpop.xlane.xlu0 %669
    %v671 = vsel %vm52, %v667, 0.0
    %672 = vadd.xlane.f32.xlu0 %v671
    %v673 = vpop.xlane.xlu0 %672
    %v674 = vmul.f32 %v670, %v65
    %v675 = vmul.f32 %v673, %v65
    %v676 = vadd.f32 %v674, 1e-05
    %v677 = vadd.f32 %v675, 1e-05
    %v678 = vrsqrt.pop %v676
    %v679 = vmul.f32 %v678, %v676
    %v680 = vmul.f32 %v679, %v678
    %v681 = vmul.f32 0.5, %v680
    %v682 = vsub.f32 1.5, %v681
    %v683 = vmul.f32 %v678, %v682
    %vm684 = vweird.f32 %v676
    %vm685 = vweird.f32 %v678
    %vm686 = vmor %vm684, %vm685
    %v687 = vsel %vm686, %v678, %v683
    %v688 = vrsqrt.pop %v677
    %v689 = vmul.f32 %v688, %v677
    %v690 = vmul.f32 %v689, %v688
    %v691 = vmul.f32 0.5, %v690
    %v692 = vsub.f32 1.5, %v691
    %v693 = vmul.f32 %v688, %v692
    %vm694 = vweird.f32 %v677
    %vm695 = vweird.f32 %v688
    %vm696 = vmor %vm694, %vm695
    %v697 = vsel %vm696, %v688, %v693
    %v698 = vmul.f32 %v664, %v687
    %v699 = vmul.f32 %v665, %v697
    %v700 = vmul.f32 %v698, %v652
    %v701 = vmul.f32 %v699, %v653
    %v702 = vadd.f32 %v700, %v654
    %v703 = vadd.f32 %v701, %v655
    %v704 = vld [vmem:[%s3 + $0xb0] sm:$0xff]
    %v705 = vld [vmem:[%s3 + $0xb8] sm:$0xff]
    %v706 = vld [vmem:[%s3 + $0xc0] sm:$0xff]
    %v707 = vld [vmem:[%s3 + $0xc8] sm:$0xff]
    %v709 = vsel %vm52, %v702, 0
    %v712 = vsel %vm52, %v703, 0
    %714 = vmatpush.msra.mxu0 0.0
    %715 = vmatpush.msra.mxu0 0.0
    %716 = vmatpush.msra.mxu0 0.0
    %717 = vmatpush.msra.mxu0 0.0
    %718 = vmatpush.msra.mxu0 0.0
    %719 = vmatpush.msra.mxu0 0.0
    %720 = vmatpush.msra.mxu0 0.0
    %721 = vmatpush.msra.mxu0 0.0
    %722 = vmatpush.msra.mxu0 0.0
    %723 = vmatpush.msra.mxu0 0.0
    %724 = vmatpush.msra.mxu0 0.0
    %725 = vmatpush.msra.mxu0 0.0
    %726 = vmatpush.msra.mxu0 %v707
    %727 = vmatpush.msra.mxu0 %v706
    %728 = vmatpush.msra.mxu0 %v705
    %729 = vmatpush.msra.mxu0 %v704
    %730 = vmatmul.f32.gmra.mxu0 %v709
    %v731 = vpop.f32.mrf.mxu0
    %v732 = vadd.f32 0.0, %v731
    %733 = vmatmul.f32.gmra.mxu0 %v712
    %v734 = vpop.f32.mrf.mxu0
    %v735 = vadd.f32 0.0, %v734
    %736 = vdwg.mxu0
    %v737 = vmul.f32 %v732, %v18
    %v738 = vmul.f32 %v735, %v19
    %v739 = vmul.f32 %v732, %v20
    %v740 = vmul.f32 %v735, %v21
    %v741 = vmul.f32 %v732, %v22
    %v742 = vmul.f32 %v735, %v23
    %v743 = vmul.f32 %v732, %v24
    %v744 = vmul.f32 %v735, %v25
    %747 = vrot.lane.b32.xlu0 %v732, 96
    %v748 = vpop.permute.xlu0 %747
    %749 = vrot.lane.b32.xlu0 %v735, 96
    %v750 = vpop.permute.xlu0 %749
    %v752 = vsel %vm52, %v737, 0
    %v755 = vsel %vm52, %v738, 0
    %v758 = vsel %vm52, %v739, 0
    %v761 = vsel %vm52, %v740, 0
    %v764 = vsel %vm52, %v741, 0
    %v767 = vsel %vm52, %v742, 0
    %v770 = vsel %vm52, %v743, 0
    %v773 = vsel %vm52, %v744, 0
    %v775 = vsel %vm52, %v748, 0
    %v777 = vsel %vm52, %v750, 0
    %779 = vmatpush.xpose.msra.mxu0 0.0
    %780 = vmatpush.xpose.msra.mxu0 0.0
    %781 = vmatpush.xpose.msra.mxu0 0.0
    %782 = vmatpush.xpose.msra.mxu0 0.0
    %783 = vmatpush.xpose.msra.mxu0 0.0
    %784 = vmatpush.xpose.msra.mxu0 0.0
    %785 = vmatpush.xpose.msra.mxu0 0.0
    %786 = vmatpush.xpose.msra.mxu0 0.0
    %787 = vmatpush.xpose.msra.mxu0 0.0
    %788 = vmatpush.xpose.msra.mxu0 0.0
    %789 = vmatpush.xpose.msra.mxu0 0.0
    %790 = vmatpush.xpose.msra.mxu0 0.0
    %791 = vmatpush.xpose.msra.mxu0 0.0
    %792 = vmatpush.xpose.msra.mxu0 0.0
    %793 = vmatpush.xpose.msra.mxu0 %v777
    %794 = vmatpush.xpose.msra.mxu0 %v775
    %795 = vmatmul.f32.gmra.mxu0 %v752
    %v796 = vpop.f32.mrf.mxu0
    %v797 = vadd.f32 %v34, %v796
    %798 = vmatmul.f32.gmra.mxu0 %v755
    %v799 = vpop.f32.mrf.mxu0
    %v800 = vadd.f32 %v35, %v799
    %801 = vmatmul.f32.gmra.mxu0 %v758
    %v802 = vpop.f32.mrf.mxu0
    %v803 = vadd.f32 %v36, %v802
    %804 = vmatmul.f32.gmra.mxu0 %v761
    %v805 = vpop.f32.mrf.mxu0
    %v806 = vadd.f32 %v37, %v805
    %807 = vmatmul.f32.gmra.mxu0 %v764
    %v808 = vpop.f32.mrf.mxu0
    %v809 = vadd.f32 %v38, %v808
    %810 = vmatmul.f32.gmra.mxu0 %v767
    %v811 = vpop.f32.mrf.mxu0
    %v812 = vadd.f32 %v39, %v811
    %813 = vmatmul.f32.gmra.mxu0 %v770
    %v814 = vpop.f32.mrf.mxu0
    %v815 = vadd.f32 %v40, %v814
    %816 = vmatmul.f32.gmra.mxu0 %v773
    %v817 = vpop.f32.mrf.mxu0
    %v818 = vadd.f32 %v41, %v817
    %819 = vdwg.mxu0
    %v820 = vsel %vm224, %v797, -inf
    %821 = vmax.xlane.f32.xlu0 %v820
    %v822 = vpop.xlane.xlu0 %821
    %v823 = vsel %vm224, %v800, -inf
    %824 = vmax.xlane.f32.xlu0 %v823
    %v825 = vpop.xlane.xlu0 %824
    %v826 = vsel %vm224, %v803, -inf
    %827 = vmax.xlane.f32.xlu0 %v826
    %v828 = vpop.xlane.xlu0 %827
    %v829 = vsel %vm224, %v806, -inf
    %830 = vmax.xlane.f32.xlu0 %v829
    %v831 = vpop.xlane.xlu0 %830
    %v832 = vsel %vm224, %v809, -inf
    %833 = vmax.xlane.f32.xlu0 %v832
    %v834 = vpop.xlane.xlu0 %833
    %v835 = vsel %vm224, %v812, -inf
    %836 = vmax.xlane.f32.xlu0 %v835
    %v837 = vpop.xlane.xlu0 %836
    %v838 = vsel %vm224, %v815, -inf
    %839 = vmax.xlane.f32.xlu0 %v838
    %v840 = vpop.xlane.xlu0 %839
    %v841 = vsel %vm224, %v818, -inf
    %842 = vmax.xlane.f32.xlu0 %v841
    %v843 = vpop.xlane.xlu0 %842
    %v844 = vsub.f32 %v797, %v822
    %v845 = vsub.f32 %v800, %v825
    %v846 = vsub.f32 %v803, %v828
    %v847 = vsub.f32 %v806, %v831
    %v848 = vsub.f32 %v809, %v834
    %v849 = vsub.f32 %v812, %v837
    %v850 = vsub.f32 %v815, %v840
    %v851 = vsub.f32 %v818, %v843
    %v852 = vmul.f32 %v844, 1.442695
    %v853 = vpow.pop %v852
    %v854 = vmul.f32 %v845, 1.442695
    %v855 = vpow.pop %v854
    %v856 = vmul.f32 %v846, 1.442695
    %v857 = vpow.pop %v856
    %v858 = vmul.f32 %v847, 1.442695
    %v859 = vpow.pop %v858
    %v860 = vmul.f32 %v848, 1.442695
    %v861 = vpow.pop %v860
    %v862 = vmul.f32 %v849, 1.442695
    %v863 = vpow.pop %v862
    %v864 = vmul.f32 %v850, 1.442695
    %v865 = vpow.pop %v864
    %v866 = vmul.f32 %v851, 1.442695
    %v867 = vpow.pop %v866
    %v868 = vsel %vm224, %v853, 0.0
    %869 = vadd.xlane.f32.xlu0 %v868
    %v870 = vpop.xlane.xlu0 %869
    %v871 = vsel %vm224, %v855, 0.0
    %872 = vadd.xlane.f32.xlu0 %v871
    %v873 = vpop.xlane.xlu0 %872
    %v874 = vsel %vm224, %v857, 0.0
    %875 = vadd.xlane.f32.xlu0 %v874
    %v876 = vpop.xlane.xlu0 %875
    %v877 = vsel %vm224, %v859, 0.0
    %878 = vadd.xlane.f32.xlu0 %v877
    %v879 = vpop.xlane.xlu0 %878
    %v880 = vsel %vm224, %v861, 0.0
    %881 = vadd.xlane.f32.xlu0 %v880
    %v882 = vpop.xlane.xlu0 %881
    %v883 = vsel %vm224, %v863, 0.0
    %884 = vadd.xlane.f32.xlu0 %v883
    %v885 = vpop.xlane.xlu0 %884
    %v886 = vsel %vm224, %v865, 0.0
    %887 = vadd.xlane.f32.xlu0 %v886
    %v888 = vpop.xlane.xlu0 %887
    %v889 = vsel %vm224, %v867, 0.0
    %890 = vadd.xlane.f32.xlu0 %v889
    %v891 = vpop.xlane.xlu0 %890
    %v892 = vrcp.pop %v870
    %v893 = vrcp.pop %v873
    %v894 = vrcp.pop %v876
    %v895 = vrcp.pop %v879
    %v896 = vrcp.pop %v882
    %v897 = vrcp.pop %v885
    %v898 = vrcp.pop %v888
    %v899 = vrcp.pop %v891
    %v900 = vmul.f32 %v853, %v892
    %v901 = vmul.f32 %v855, %v893
    %v902 = vmul.f32 %v857, %v894
    %v903 = vmul.f32 %v859, %v895
    %v904 = vmul.f32 %v861, %v896
    %v905 = vmul.f32 %v863, %v897
    %v906 = vmul.f32 %v865, %v898
    %v907 = vmul.f32 %v867, %v899
    %908 = vrot.lane.b32.xlu0 %v732, 64
    %v909 = vpop.permute.xlu0 %908
    %910 = vrot.lane.b32.xlu0 %v735, 64
    %v911 = vpop.permute.xlu0 %910
    %v915 = vsel %vm224, %v900, 0
    %v918 = vsel %vm224, %v901, 0
    %v921 = vsel %vm224, %v902, 0
    %v924 = vsel %vm224, %v903, 0
    %v927 = vsel %vm224, %v904, 0
    %v930 = vsel %vm224, %v905, 0
    %v933 = vsel %vm224, %v906, 0
    %v936 = vsel %vm224, %v907, 0
    %938 = vmatpush.msra.mxu0 0.0
    %939 = vmatpush.msra.mxu0 0.0
    %940 = vmatpush.msra.mxu0 0.0
    %941 = vmatpush.msra.mxu0 0.0
    %942 = vmatpush.msra.mxu0 0.0
    %943 = vmatpush.msra.mxu0 0.0
    %944 = vmatpush.msra.mxu0 0.0
    %945 = vmatpush.msra.mxu0 0.0
    %946 = vmatpush.msra.mxu0 0.0
    %947 = vmatpush.msra.mxu0 0.0
    %948 = vmatpush.msra.mxu0 0.0
    %949 = vmatpush.msra.mxu0 0.0
    %950 = vmatpush.msra.mxu0 0.0
    %951 = vmatpush.msra.mxu0 0.0
    %952 = vmatpush.msra.mxu0 %v911
    %953 = vmatpush.msra.mxu0 %v909
    %954 = vmatmul.f32.gmra.mxu0 %v915
    %v955 = vpop.f32.mrf.mxu0
    %v956 = vadd.f32 0.0, %v955
    %957 = vmatmul.f32.gmra.mxu0 %v918
    %v958 = vpop.f32.mrf.mxu0
    %v959 = vadd.f32 0.0, %v958
    %960 = vmatmul.f32.gmra.mxu0 %v921
    %v961 = vpop.f32.mrf.mxu0
    %v962 = vadd.f32 0.0, %v961
    %963 = vmatmul.f32.gmra.mxu0 %v924
    %v964 = vpop.f32.mrf.mxu0
    %v965 = vadd.f32 0.0, %v964
    %966 = vmatmul.f32.gmra.mxu0 %v927
    %v967 = vpop.f32.mrf.mxu0
    %v968 = vadd.f32 0.0, %v967
    %969 = vmatmul.f32.gmra.mxu0 %v930
    %v970 = vpop.f32.mrf.mxu0
    %v971 = vadd.f32 0.0, %v970
    %972 = vmatmul.f32.gmra.mxu0 %v933
    %v973 = vpop.f32.mrf.mxu0
    %v974 = vadd.f32 0.0, %v973
    %975 = vmatmul.f32.gmra.mxu0 %v936
    %v976 = vpop.f32.mrf.mxu0
    %v977 = vadd.f32 0.0, %v976
    %978 = vdwg.mxu0
    %v979 = vmul.f32 %v956, %v26
    %v980 = vmul.f32 %v959, %v27
    %v981 = vmul.f32 %v962, %v28
    %v982 = vmul.f32 %v965, %v29
    %v983 = vmul.f32 %v968, %v30
    %v984 = vmul.f32 %v971, %v31
    %v985 = vmul.f32 %v974, %v32
    %v986 = vmul.f32 %v977, %v33
    %v987 = vadd.f32 %v979, %v981
    %v988 = vadd.f32 %v980, %v982
    %v989 = vadd.f32 %v983, %v985
    %v990 = vadd.f32 %v984, %v986
    %v991 = vadd.f32 %v987, %v989
    %v992 = vadd.f32 %v988, %v990
    %v993 = vld [vmem:[%s3 + $0xd0] sm:$0xff]
    %v994 = vld [vmem:[%s3 + $0xd8] sm:$0xff]
    %v995 = vld [vmem:[%s3 + $0xe0] sm:$0xff]
    %v996 = vld [vmem:[%s3 + $0xe8] sm:$0xff]
    %v998 = vsel %vm52, %v991, 0
    %v1001 = vsel %vm52, %v992, 0
    %1003 = vmatpush.msra.mxu0 0.0
    %1004 = vmatpush.msra.mxu0 0.0
    %1005 = vmatpush.msra.mxu0 0.0
    %1006 = vmatpush.msra.mxu0 0.0
    %1007 = vmatpush.msra.mxu0 0.0
    %1008 = vmatpush.msra.mxu0 0.0
    %1009 = vmatpush.msra.mxu0 0.0
    %1010 = vmatpush.msra.mxu0 0.0
    %1011 = vmatpush.msra.mxu0 0.0
    %1012 = vmatpush.msra.mxu0 0.0
    %1013 = vmatpush.msra.mxu0 0.0
    %1014 = vmatpush.msra.mxu0 0.0
    %1015 = vmatpush.msra.mxu0 %v996
    %1016 = vmatpush.msra.mxu0 %v995
    %1017 = vmatpush.msra.mxu0 %v994
    %1018 = vmatpush.msra.mxu0 %v993
    %1019 = vmatmul.f32.gmra.mxu0 %v998
    %v1020 = vpop.f32.mrf.mxu0
    %v1021 = vadd.f32 0.0, %v1020
    %1022 = vmatmul.f32.gmra.mxu0 %v1001
    %v1023 = vpop.f32.mrf.mxu0
    %v1024 = vadd.f32 0.0, %v1023
    %1025 = vdwg.mxu0
    %v1026 = vadd.f32 %v650, %v1021
    %v1027 = vadd.f32 %v651, %v1024
    %v1028 = vld [vmem:[%s2 + $0x80] sm:$0xff]
    %v1029 = vld [vmem:[%s2 + $0x88] sm:$0xff]
    %v1030 = vadd.f32 %v1026, %v1028
    %v1031 = vadd.f32 %v1027, %v1029
    %v1032 = vld [vmem:[%s2 + $0x90] sm:$0xff]
    %v1033 = vld [vmem:[%s2 + $0x98] sm:$0xff]
    %v1034 = vld [vmem:[%s2 + $0xa0] sm:$0xff]
    %v1035 = vld [vmem:[%s2 + $0xa8] sm:$0xff]
    %v1036 = vsel %vm52, %v1030, 0.0
    %1037 = vadd.xlane.f32.xlu0 %v1036
    %v1038 = vpop.xlane.xlu0 %1037
    %v1039 = vsel %vm52, %v1031, 0.0
    %1040 = vadd.xlane.f32.xlu0 %v1039
    %v1041 = vpop.xlane.xlu0 %1040
    %v1042 = vmul.f32 %v1038, %v65
    %v1043 = vmul.f32 %v1041, %v65
    %v1044 = vsub.f32 %v1030, %v1042
    %v1045 = vsub.f32 %v1031, %v1043
    %v1046 = vmul.f32 %v1044, %v1044
    %v1047 = vmul.f32 %v1045, %v1045
    %v1048 = vsel %vm52, %v1046, 0.0
    %1049 = vadd.xlane.f32.xlu0 %v1048
    %v1050 = vpop.xlane.xlu0 %1049
    %v1051 = vsel %vm52, %v1047, 0.0
    %1052 = vadd.xlane.f32.xlu0 %v1051
    %v1053 = vpop.xlane.xlu0 %1052
    %v1054 = vmul.f32 %v1050, %v65
    %v1055 = vmul.f32 %v1053, %v65
    %v1056 = vadd.f32 %v1054, 1e-05
    %v1057 = vadd.f32 %v1055, 1e-05
    %v1058 = vrsqrt.pop %v1056
    %v1059 = vmul.f32 %v1058, %v1056
    %v1060 = vmul.f32 %v1059, %v1058
    %v1061 = vmul.f32 0.5, %v1060
    %v1062 = vsub.f32 1.5, %v1061
    %v1063 = vmul.f32 %v1058, %v1062
    %vm1064 = vweird.f32 %v1056
    %vm1065 = vweird.f32 %v1058
    %vm1066 = vmor %vm1064, %vm1065
    %v1067 = vsel %vm1066, %v1058, %v1063
    %v1068 = vrsqrt.pop %v1057
    %v1069 = vmul.f32 %v1068, %v1057
    %v1070 = vmul.f32 %v1069, %v1068
    %v1071 = vmul.f32 0.5, %v1070
    %v1072 = vsub.f32 1.5, %v1071
    %v1073 = vmul.f32 %v1068, %v1072
    %vm1074 = vweird.f32 %v1057
    %vm1075 = vweird.f32 %v1068
    %vm1076 = vmor %vm1074, %vm1075
    %v1077 = vsel %vm1076, %v1068, %v1073
    %v1078 = vmul.f32 %v1044, %v1067
    %v1079 = vmul.f32 %v1045, %v1077
    %v1080 = vmul.f32 %v1078, %v1032
    %v1081 = vmul.f32 %v1079, %v1033
    %v1082 = vadd.f32 %v1080, %v1034
    %v1083 = vadd.f32 %v1081, %v1035
    %v1084 = vld [vmem:[%s3 + $0xf0] sm:$0xff]
    %v1085 = vld [vmem:[%s3 + $0xf8] sm:$0xff]
    %v1086 = vld [vmem:[%s3 + $0x100] sm:$0xff]
    %v1087 = vld [vmem:[%s3 + $0x108] sm:$0xff]
    %v1088 = vld [vmem:[%s3 + $0x150] sm:$0xff]
    %v1089 = vld [vmem:[%s3 + $0x158] sm:$0xff]
    %v1091 = vsel %vm52, %v1082, 0
    %v1094 = vsel %vm52, %v1083, 0
    %1096 = vmatpush.msra.mxu0 0.0
    %1097 = vmatpush.msra.mxu0 0.0
    %1098 = vmatpush.msra.mxu0 0.0
    %1099 = vmatpush.msra.mxu0 0.0
    %1100 = vmatpush.msra.mxu0 0.0
    %1101 = vmatpush.msra.mxu0 0.0
    %1102 = vmatpush.msra.mxu0 0.0
    %1103 = vmatpush.msra.mxu0 0.0
    %1104 = vmatpush.msra.mxu0 0.0
    %1105 = vmatpush.msra.mxu0 0.0
    %1106 = vmatpush.msra.mxu0 0.0
    %1107 = vmatpush.msra.mxu0 0.0
    %1108 = vmatpush.msra.mxu0 %v1087
    %1109 = vmatpush.msra.mxu0 %v1086
    %1110 = vmatpush.msra.mxu0 %v1085
    %1111 = vmatpush.msra.mxu0 %v1084
    %1112 = vmatmul.f32.gmra.mxu0 %v1091
    %v1113 = vpop.f32.mrf.mxu0
    %v1114 = vadd.f32 %v1088, %v1113
    %1115 = vmatmul.f32.gmra.mxu0 %v1094
    %v1116 = vpop.f32.mrf.mxu0
    %v1117 = vadd.f32 %v1089, %v1116
    %1118 = vdwg.mxu0
    %v1119 = vmul.f32 %v1114, 0.5
    %v1120 = vmul.f32 %v1117, 0.5
    %v1121 = vmul.f32 %v1114, 0.70710677
    %v1122 = vmul.f32 %v1117, 0.70710677
    %vm1123 = vcmp.ge.f32.partialorder %v1121, 0.0
    %vm1124 = vcmp.ge.f32.partialorder %v1122, 0.0
    %v1125 = vsel %vm1123, 1.0, -1.0
    %v1126 = vsel %vm1124, 1.0, -1.0
    %v1127 = vand.u32 2147483647, %v1121
    %v1128 = vand.u32 2147483647, %v1122
    %v1129 = vmul.f32 %v1127, 0.3275911
    %v1130 = vmul.f32 %v1128, 0.3275911
    %v1131 = vadd.f32 %v1129, 1.0
    %v1132 = vadd.f32 %v1130, 1.0
    %v1133 = vrcp.pop %v1131
    %v1134 = vmul.f32 %v1131, %v1133
    %v1135 = vsub.f32 1.0, %v1134
    %v1136 = vmul.f32 %v1133, %v1135
    %v1137 = vadd.f32 %v1133, %v1136
    %vm1138 = vweird.f32 %v1131
    %vm1139 = vweird.f32 %v1133
    %vm1140 = vmor %vm1138, %vm1139
    %v1141 = vsel %vm1140, %v1133, %v1137
    %v1142 = vand.u32 2147483647, %v1131
    %vm1143 = vcmp.eq.f32.partialorder %v1142, 8.507059e+37
    %v1144 = vand.u32 %v1131, 2147483648
    %v1145 = vor.u32 1.1754944e-38, %v1144
    %v1146 = vsel %vm1143, %v1145, %v1141
    %v1147 = vmul.f32 1.0, %v1146
    %v1148 = vrcp.pop %v1132
    %v1149 = vmul.f32 %v1132, %v1148
    %v1150 = vsub.f32 1.0, %v1149
    %v1151 = vmul.f32 %v1148, %v1150
    %v1152 = vadd.f32 %v1148, %v1151
    %vm1153 = vweird.f32 %v1132
    %vm1154 = vweird.f32 %v1148
    %vm1155 = vmor %vm1153, %vm1154
    %v1156 = vsel %vm1155, %v1148, %v1152
    %v1157 = vand.u32 2147483647, %v1132
    %vm1158 = vcmp.eq.f32.partialorder %v1157, 8.507059e+37
    %v1159 = vand.u32 %v1132, 2147483648
    %v1160 = vor.u32 1.1754944e-38, %v1159
    %v1161 = vsel %vm1158, %v1160, %v1156
    %v1162 = vmul.f32 1.0, %v1161
    %v1163 = vmul.f32 %v1147, 1.0614054
    %v1164 = vmul.f32 %v1162, 1.0614054
    %v1165 = vadd.f32 %v1163, -1.4531521
    %v1166 = vadd.f32 %v1164, -1.4531521
    %v1167 = vmul.f32 %v1165, %v1147
    %v1168 = vmul.f32 %v1166, %v1162
    %v1169 = vadd.f32 %v1167, 1.4214138
    %v1170 = vadd.f32 %v1168, 1.4214138
    %v1171 = vmul.f32 %v1169, %v1147
    %v1172 = vmul.f32 %v1170, %v1162
    %v1173 = vadd.f32 %v1171, -0.28449672
    %v1174 = vadd.f32 %v1172, -0.28449672
    %v1175 = vmul.f32 %v1173, %v1147
    %v1176 = vmul.f32 %v1174, %v1162
    %v1177 = vadd.f32 %v1175, 0.2548296
    %v1178 = vadd.f32 %v1176, 0.2548296
    %v1179 = vmul.f32 %v1177, %v1147
    %v1180 = vmul.f32 %v1178, %v1162
    %v1181 = vsub.f32 0.0, %v1127
    %v1182 = vsub.f32 0.0, %v1128
    %v1183 = vmul.f32 %v1181, %v1127
    %v1184 = vmul.f32 %v1182, %v1128
    %v1185 = vmul.f32 %v1183, 1.442695
    %v1186 = vpow.pop %v1185
    %v1187 = vmul.f32 %v1184, 1.442695
    %v1188 = vpow.pop %v1187
    %v1189 = vmul.f32 %v1179, %v1186
    %v1190 = vmul.f32 %v1180, %v1188
    %v1191 = vsub.f32 1.0, %v1189
    %v1192 = vsub.f32 1.0, %v1190
    %v1193 = vmul.f32 %v1125, %v1191
    %v1194 = vmul.f32 %v1126, %v1192
    %v1195 = vadd.f32 %v1193, 1.0
    %v1196 = vadd.f32 %v1194, 1.0
    %v1197 = vmul.f32 %v1119, %v1195
    %v1198 = vmul.f32 %v1120, %v1196
    %v1199 = vld [vmem:[%s3 + $0x110] sm:$0xff]
    %v1200 = vld [vmem:[%s3 + $0x118] sm:$0xff]
    %v1201 = vld [vmem:[%s3 + $0x120] sm:$0xff]
    %v1202 = vld [vmem:[%s3 + $0x128] sm:$0xff]
    %v1203 = vld [vmem:[%s3 + $0x130] sm:$0xff]
    %v1204 = vld [vmem:[%s3 + $0x138] sm:$0xff]
    %v1205 = vld [vmem:[%s3 + $0x140] sm:$0xff]
    %v1206 = vld [vmem:[%s3 + $0x148] sm:$0xff]
    %v1208 = vsel %vm612, %v1197, 0
    %v1211 = vsel %vm612, %v1198, 0
    %1213 = vmatpush.msra.mxu0 0.0
    %1214 = vmatpush.msra.mxu0 0.0
    %1215 = vmatpush.msra.mxu0 0.0
    %1216 = vmatpush.msra.mxu0 0.0
    %1217 = vmatpush.msra.mxu0 0.0
    %1218 = vmatpush.msra.mxu0 0.0
    %1219 = vmatpush.msra.mxu0 0.0
    %1220 = vmatpush.msra.mxu0 0.0
    %1221 = vmatpush.msra.mxu0 %v1206
    %1222 = vmatpush.msra.mxu0 %v1205
    %1223 = vmatpush.msra.mxu0 %v1204
    %1224 = vmatpush.msra.mxu0 %v1203
    %1225 = vmatpush.msra.mxu0 %v1202
    %1226 = vmatpush.msra.mxu0 %v1201
    %1227 = vmatpush.msra.mxu0 %v1200
    %1228 = vmatpush.msra.mxu0 %v1199
    %1229 = vmatmul.f32.gmra.mxu0 %v1208
    %v1230 = vpop.f32.mrf.mxu0
    %v1231 = vadd.f32 0.0, %v1230
    %1232 = vmatmul.f32.gmra.mxu0 %v1211
    %v1233 = vpop.f32.mrf.mxu0
    %v1234 = vadd.f32 0.0, %v1233
    %1235 = vdwg.mxu0
    %v1236 = vadd.f32 %v1030, %v1231
    %v1237 = vadd.f32 %v1031, %v1234
    %v1238 = vld [vmem:[%s2 + $0xb0] sm:$0xff]
    %v1239 = vld [vmem:[%s2 + $0xb8] sm:$0xff]
    %v1240 = vadd.f32 %v1236, %v1238
    %v1241 = vadd.f32 %v1237, %v1239
    %v1242 = vld [vmem:[%s2 + $0xc0] sm:$0xff]
    %v1243 = vld [vmem:[%s2 + $0xc8] sm:$0xff]
    %v1244 = vld [vmem:[%s2 + $0xd0] sm:$0xff]
    %v1245 = vld [vmem:[%s2 + $0xd8] sm:$0xff]
    %v1246 = vsel %vm52, %v1240, 0.0
    %1247 = vadd.xlane.f32.xlu0 %v1246
    %v1248 = vpop.xlane.xlu0 %1247
    %v1249 = vsel %vm52, %v1241, 0.0
    %1250 = vadd.xlane.f32.xlu0 %v1249
    %v1251 = vpop.xlane.xlu0 %1250
    %v1252 = vmul.f32 %v1248, %v65
    %v1253 = vmul.f32 %v1251, %v65
    %v1254 = vsub.f32 %v1240, %v1252
    %v1255 = vsub.f32 %v1241, %v1253
    %v1256 = vmul.f32 %v1254, %v1254
    %v1257 = vmul.f32 %v1255, %v1255
    %v1258 = vsel %vm52, %v1256, 0.0
    %1259 = vadd.xlane.f32.xlu0 %v1258
    %v1260 = vpop.xlane.xlu0 %1259
    %v1261 = vsel %vm52, %v1257, 0.0
    %1262 = vadd.xlane.f32.xlu0 %v1261
    %v1263 = vpop.xlane.xlu0 %1262
    %v1264 = vmul.f32 %v1260, %v65
    %v1265 = vmul.f32 %v1263, %v65
    %v1266 = vadd.f32 %v1264, 1e-05
    %v1267 = vadd.f32 %v1265, 1e-05
    %v1268 = vrsqrt.pop %v1266
    %v1269 = vmul.f32 %v1268, %v1266
    %v1270 = vmul.f32 %v1269, %v1268
    %v1271 = vmul.f32 0.5, %v1270
    %v1272 = vsub.f32 1.5, %v1271
    %v1273 = vmul.f32 %v1268, %v1272
    %vm1274 = vweird.f32 %v1266
    %vm1275 = vweird.f32 %v1268
    %vm1276 = vmor %vm1274, %vm1275
    %v1277 = vsel %vm1276, %v1268, %v1273
    %v1278 = vrsqrt.pop %v1267
    %v1279 = vmul.f32 %v1278, %v1267
    %v1280 = vmul.f32 %v1279, %v1278
    %v1281 = vmul.f32 0.5, %v1280
    %v1282 = vsub.f32 1.5, %v1281
    %v1283 = vmul.f32 %v1278, %v1282
    %vm1284 = vweird.f32 %v1267
    %vm1285 = vweird.f32 %v1278
    %vm1286 = vmor %vm1284, %vm1285
    %v1287 = vsel %vm1286, %v1278, %v1283
    %v1288 = vmul.f32 %v1254, %v1277
    %v1289 = vmul.f32 %v1255, %v1287
    %v1290 = vmul.f32 %v1288, %v1242
    %v1291 = vmul.f32 %v1289, %v1243
    %v1292 = vadd.f32 %v1290, %v1244
    %v1293 = vadd.f32 %v1291, %v1245
    %1294 = vst.msk [vmem:[#allocation2] sm:$0xff] %vm52, %v1292
    %1295 = vst.msk [vmem:[#allocation2 + $0x8] sm:$0xff] %vm52, %v1293
    // Predicated region
    $region18: #{tpu_custom_call.1} parent=1 // pred_check
      _
    $region19: #{tpu_custom_call.1} parent=1 // pred_check_branch
      %1297 = sbr.rel (0) target = $region21
    $region20: #{tpu_custom_call.1} parent=1 // pred_region
      %1299 = vsyncadd [#allocation3], 0
      %s1300 = sshll.u32 [#allocation2], 4
      %s1301 = int_to_ptr.vmem [resolvable:$true] %s1300
      %s1302 = sshll.u32 %s4, 4
      %s1303 = int_to_ptr.hbm [resolvable:$true] %s1302
      %1308 = dma.vmem_to_hbm [thread:$0]  %s1301, 256, %s1303, [#allocation3], 128, 128, 8
    $region21: #{tpu_custom_call.1} parent=1 // pred_fallthru
      _
    // Predicated region
    $region22: #{tpu_custom_call.1} parent=1 // pred_check
      _
    $region23: #{tpu_custom_call.1} parent=1 // pred_check_branch
      %1310 = sbr.rel (0) target = $region25
    $region24: #{tpu_custom_call.1} parent=1 // pred_region
      %1312 = dma.done [#allocation3], 256
    $region25: #{tpu_custom_call.1} parent=1 // pred_fallthru
      _
    %1313 = vsyncpa [#allocation3], 1

</llo_original>
